<compile_context>
chip_gen: v5e
topology: v5e:2x2
jax: 0.10.0
libtpu: 0.0.40
codegen_flags: <defaults>
</compile_context>

<pallas_src>
import functools

import jax
import jax.numpy as jnp
import numpy as np
from jax.experimental import pallas as pl
from jax.experimental.pallas import tpu as pltpu


def _round_up(v, m):
    return -(-v // m) * m


# ----------------------------- Pallas kernel --------------------------------

def _conv_mm_kernel(a_ref, w_ref, b_ref, o_ref, *, apply_silu):
    """One M-tile of (patches @ weights) + bias, optional fused SiLU epilogue."""
    acc = jnp.dot(a_ref[...], w_ref[...], preferred_element_type=jnp.float32)
    y = acc + b_ref[...]                       # bias (+ folded BN shift), f32
    if apply_silu:
        y = y * jax.nn.sigmoid(y)              # sigmoid -> EUP slot (free under MXU)
    o_ref[...] = y.astype(o_ref.dtype)


def conv_matmul(a, w, bias, *, apply_silu=False, out_dtype=jnp.bfloat16, tm=512):
    """Batched-over-branch matmul: (B,M,K) @ (B,K,N) + bias(B,1,N) [+ SiLU].

    Tiled over M only; K/N (small conv channel dims) stay fully VMEM resident
    with constant index_maps so weights are fetched once per branch, and both
    grid axes are 'parallel' (v7x megacore).
    """
    B, M, K = a.shape
    _, _, N = w.shape
    # 16-row alignment for bf16 sublane tiling; ragged M edge handled by grid.
    tm = max(16, min(tm, (M // 16) * 16))
    grid = (B, pl.cdiv(M, tm))

    a = a.astype(jnp.bfloat16)                 # bf16 MXU inputs, f32 accumulate
    w = w.astype(jnp.bfloat16)
    bias = bias.astype(jnp.float32)

    return pl.pallas_call(
        functools.partial(_conv_mm_kernel, apply_silu=apply_silu),
        out_shape=jax.ShapeDtypeStruct((B, M, N), out_dtype),
        grid=grid,
        in_specs=[
            pl.BlockSpec((None, tm, K), lambda b, i: (b, i, 0)),   # A: M-tiled
            pl.BlockSpec((None, K, N), lambda b, i: (b, 0, 0)),    # W: resident
            pl.BlockSpec((None, 1, N), lambda b, i: (b, 0, 0)),    # bias: resident
        ],
        out_specs=pl.BlockSpec((None, tm, N), lambda b, i: (b, i, 0)),
        compiler_params=pltpu.CompilerParams(
            dimension_semantics=("parallel", "parallel")),
    )(a, w, bias)


# ----------------------------- conv glue (NHWC) ------------------------------

def _im2col(x_nhwc, k, s, pad):
    """Extract k*k patches from NHWC -> (N, Ho*Wo, k*k*C)."""
    # TODO(synk): the k*k tap stack is still materialised in HBM by XLA; the
    # remaining optimisation is generating patches per M-tile in VMEM inside
    # the matmul kernel (halo'd shifted loads).
    if pad:
        x_nhwc = jnp.pad(x_nhwc, ((0, 0), (pad, pad), (pad, pad), (0, 0)))
    N, Hp, Wp, C = x_nhwc.shape
    Ho = (Hp - k) // s + 1
    Wo = (Wp - k) // s + 1
    cols = [x_nhwc[:, di:di + s * Ho:s, dj:dj + s * Wo:s, :]
            for di in range(k) for dj in range(k)]
    patches = jnp.stack(cols, axis=-2)                  # (N, Ho, Wo, k*k, C)
    return patches.reshape(N, Ho * Wo, k * k * C), (Ho, Wo)


def _w_mat(w_oihw):
    """OIHW conv weight -> (kh*kw*Cin, Cout), matching _im2col column order."""
    Cout, Cin, kh, kw = w_oihw.shape
    return jnp.transpose(w_oihw, (2, 3, 1, 0)).reshape(kh * kw * Cin, Cout)


# ----------------------------- parameters ------------------------------------

def init_params(key, c1, c2, k):
    assert c2 % 2 == 0
    half = c2 // 2
    down = half // 2
    keys = jax.random.split(key, 16)

    def w(kk, shape):
        return (0.1 * jax.random.normal(kk, shape)).astype(jnp.float32)

    p = {}
    p['w_rgb1'] = w(keys[0], (half, 3, k, k))                       # no bias
    p['w_ir1'] = w(keys[1], (half, c1 - 3, k, k)) if c1 > 3 else None
    for i, name in enumerate(['rgb', 'ir']):
        base = 2 + i * 6
        p[f'{name}_s1_w'] = w(keys[base + 0], (down, half, 1, 1))   # 1x1
        p[f'{name}_s1_b'] = w(keys[base + 1], (down,))
        p[f'{name}_s2_w'] = w(keys[base + 2], (half, down, 3, 3))   # 3x3, pad 0
        p[f'{name}_s2_b'] = w(keys[base + 3], (half,))
        p[f'{name}_s3_w'] = w(keys[base + 4], (half, half, 1, 1))   # 1x1
        p[f'{name}_s3_b'] = w(keys[base + 5], (half,))
    for name, kk in (('rgb', keys[14]), ('ir', keys[15])):
        sub = jax.random.split(kk, 4)
        p[f'bn_{name}_gamma'] = 1.0 + 0.1 * jax.random.normal(sub[0], (half,))
        p[f'bn_{name}_beta'] = 0.1 * jax.random.normal(sub[1], (half,))
        p[f'bn_{name}_mean'] = 0.1 * jax.random.normal(sub[2], (half,))
        p[f'bn_{name}_var'] = 1.0 + 0.1 * jax.random.uniform(sub[3], (half,))
    return p


def prepare_params(p, c1):
    """One-time prep: fold eval-mode BN into the last stem conv, convert conv
    weights to matmul form, stack rgb/ir along a leading branch axis."""
    has_ir = (c1 > 3) and (p.get('w_ir1') is not None)
    names = ['rgb', 'ir'] if has_ir else ['rgb']
    ci = max(3, c1 - 3) if has_ir else 3        # common conv1 input width

    w1 = []
    for name in names:
        w = p['w_rgb1'] if name == 'rgb' else p['w_ir1']
        w = jnp.pad(w, ((0, 0), (0, ci - w.shape[1]), (0, 0), (0, 0)))
        w1.append(_w_mat(w))
    half = w1[0].shape[-1]

    q = {'has_ir': has_ir, 'ci': ci}
    q['w1'] = jnp.stack(w1).astype(jnp.bfloat16)
    q['b1'] = jnp.zeros((len(names), 1, half), jnp.float32)

    for stage in ('s1', 's2', 's3'):
        ws, bs = [], []
        for name in names:
            w = _w_mat(p[f'{name}_{stage}_w'])
            b = p[f'{name}_{stage}_b']
            if stage == 's3':                   # fold BatchNorm(eval, eps=1e-3)
                scale = p[f'bn_{name}_gamma'] / jnp.sqrt(p[f'bn_{name}_var'] + 1e-3)
                shift = p[f'bn_{name}_beta'] - p[f'bn_{name}_mean'] * scale
                w = w * scale[None, :]
                b = b * scale + shift
            ws.append(w)
            bs.append(b.reshape(1, -1))
        q[f'w_{stage}'] = jnp.stack(ws).astype(jnp.bfloat16)
        q[f'b_{stage}'] = jnp.stack(bs).astype(jnp.float32)
    return q


# ----------------------------- EarlyFusion forward ---------------------------

def early_fusion_forward(x_nchw, q, k, s, fusion_mode=0):
    """EarlyFusion.forward (eval mode).  NCHW in / NCHW out; NHWC inside."""
    if fusion_mode != 0:
        # TODO(synk): fusion_mode==1 reads self.fusion_weights, which the
        # PyTorch __init__ never defines (would raise AttributeError there too).
        raise NotImplementedError("fusion_mode != 0 is not implemented")

    pad = k // 2                                    # autopad(k, None, 1)
    c1 = x_nchw.shape[1]
    has_ir = q['has_ir'] and c1 > 3
    nb = 2 if has_ir else 1
    ci = q['ci']

    x = jnp.transpose(x_nchw, (0, 2, 3, 1)).astype(jnp.float32)   # -> NHWC
    N, H, W, _ = x.shape

    rgb_in = x[..., :3]
    if has_ir:
        ir_in = x[..., 3:]
        rgb_in = jnp.pad(rgb_in, ((0, 0),) * 3 + ((0, ci - 3),))
        ir_in = jnp.pad(ir_in, ((0, 0),) * 3 + ((0, ci - ir_in.shape[-1]),))
        xin = jnp.stack([rgb_in, ir_in])            # (2, N, H, W, ci)
    else:
        xin = rgb_in[None]                          # (1, N, H, W, 3)

    # ---- rgb_conv1 / ir_conv1: k x k, stride s, autopad, bias-free ----
    patches, (H1, W1) = _im2col(xin.reshape(nb * N, H, W, ci), k, s, pad)
    a = patches.reshape(nb, N * H1 * W1, -1)
    f = conv_matmul(a, q['w1'], q['b1'])            # (nb, M1, half)

    # ---- stem 1x1 (no im2col: activations are already (M, C)) ----
    f = conv_matmul(f, q['w_s1'], q['b_s1'])        # (nb, M1, down)
    down = f.shape[-1]

    # ---- stem 3x3, stride 1, pad 0 ----
    patches, (H2, W2) = _im2col(f.reshape(nb * N, H1, W1, down), 3, 1, 0)
    a = patches.reshape(nb, N * H2 * W2, -1)
    f = conv_matmul(a, q['w_s2'], q['b_s2'])        # (nb, M2, half)

    # ---- stem 1x1 with BatchNorm folded in + fused SiLU epilogue ----
    f = conv_matmul(f, q['w_s3'], q['b_s3'], apply_silu=True,
                    out_dtype=jnp.float32)          # (nb, M2, half)

    half = f.shape[-1]
    f = f.reshape(nb, N, H2, W2, half)
    rgb_out = jnp.transpose(f[0], (0, 3, 1, 2))     # NCHW only at the boundary
    ir_out = (jnp.transpose(f[1], (0, 3, 1, 2)) if has_ir
              else jnp.zeros_like(rgb_out))
    return jnp.concatenate([rgb_out, ir_out], axis=1)


# ----------------------------- pure-JAX reference ----------------------------

def _ref_conv(x, w, s, pad, b=None):
    y = jax.lax.conv_general_dilated(x, w, (s, s), ((pad, pad), (pad, pad)),
                                     dimension_numbers=('NCHW', 'OIHW', 'NCHW'))
    if b is not None:
        y = y + b[None, :, None, None]
    return y


def ref_forward(x, p, k, s):
    pad = k // 2

    def branch(inp, w1, name):
        f = _ref_conv(inp, w1, s, pad)
        f = _ref_conv(f, p[f'{name}_s1_w'], 1, 0, p[f'{name}_s1_b'])
        f = _ref_conv(f, p[f'{name}_s2_w'], 1, 0, p[f'{name}_s2_b'])
        f = _ref_conv(f, p[f'{name}_s3_w'], 1, 0, p[f'{name}_s3_b'])
        scale = p[f'bn_{name}_gamma'] / jnp.sqrt(p[f'bn_{name}_var'] + 1e-3)
        shift = p[f'bn_{name}_beta'] - p[f'bn_{name}_mean'] * scale
        y = f * scale[None, :, None, None] + shift[None, :, None, None]
        return y * jax.nn.sigmoid(y)

    rgb = branch(x[:, :3], p['w_rgb1'], 'rgb')
    ir = branch(x[:, 3:], p['w_ir1'], 'ir')
    return jnp.concatenate([rgb, ir], axis=1)


if __name__ == "__main__":
    key = jax.random.PRNGKey(0)
    kx, kp = jax.random.split(key)

    # EarlyFusion(c1=4, c2=16, k=3, s=2): 3 RGB channels + 1 IR channel.
    c1, c2, k, s = 4, 16, 3, 2
    x = jax.random.normal(kx, (2, c1, 16, 16), jnp.float32)
    raw = init_params(kp, c1, c2, k)
    params = prepare_params(raw, c1)

    @jax.jit
    def fwd(inp):
        return early_fusion_forward(inp, params, k, s)

    out = jax.block_until_ready(fwd(x))

    # 16x16 -> conv1(s=2, p=1): 8x8 -> stem 3x3 (no pad): 6x6; channels = c2.
    assert out.shape == (2, c2, 6, 6), out.shape

    ref = jax.block_until_ready(ref_forward(x, raw, k, s))
    # bf16 MXU inputs / bf16 intermediate activations -> looser tolerance vs
    # the pure-f32 reference.
    np.testing.assert_allclose(np.asarray(out), np.asarray(ref),
                               rtol=3e-2, atol=3e-2)
    print("KERNEL_OK")
</pallas_src>

<mosaic_0001>
module attributes {stable_mosaic.version = 11 : i64} {
  func.func @_conv_mm_kernel(%arg0: i32, %arg1: i32, %arg2: memref<1x128x8xbf16, #tpu.memory_space<vmem>>, %arg3: memref<1x8x4xbf16, #tpu.memory_space<vmem>>, %arg4: memref<1x1x4xf32, #tpu.memory_space<vmem>>, %arg5: memref<1x128x4xbf16, #tpu.memory_space<vmem>>) attributes {dimension_semantics = [#tpu.dimension_semantics<parallel>, #tpu.dimension_semantics<parallel>], iteration_bounds = array<i64: 2, 1>, scalar_prefetch = 0 : i64, scratch_operands = 0 : i64, tpu.core_type = #tpu.core_type<tc>, window_params = [{transform_indices = @transform_0, window_bounds = array<i64: 1, 128, 8>}, {transform_indices = @transform_1, window_bounds = array<i64: 1, 8, 4>}, {transform_indices = @transform_2, window_bounds = array<i64: 1, 1, 4>}, {transform_indices = @transform_3, window_bounds = array<i64: 1, 128, 4>}]} {
    %c0 = arith.constant 0 : index
    %c0_0 = arith.constant 0 : index
    %c0_1 = arith.constant 0 : index
    %0 = vector.load %arg2[%c0, %c0_0, %c0_1] : memref<1x128x8xbf16, #tpu.memory_space<vmem>>, vector<1x128x8xbf16>
    %1 = vector.shape_cast %0 : vector<1x128x8xbf16> to vector<128x8xbf16>
    %c0_2 = arith.constant 0 : index
    %c0_3 = arith.constant 0 : index
    %c0_4 = arith.constant 0 : index
    %2 = vector.load %arg3[%c0_2, %c0_3, %c0_4] : memref<1x8x4xbf16, #tpu.memory_space<vmem>>, vector<1x8x4xbf16>
    %3 = vector.shape_cast %2 : vector<1x8x4xbf16> to vector<8x4xbf16>
    %cst = arith.constant dense<0.000000e+00> : vector<128x4xf32>
    %4 = tpu.matmul %1, %3, %cst {dimension_numbers = #tpu.dot_dimension_numbers<[1], [0], [0], [1], [0, 0, 1, 1], [], []>} : vector<128x8xbf16>, vector<8x4xbf16>, vector<128x4xf32> -> vector<128x4xf32>
    %c0_5 = arith.constant 0 : index
    %c0_6 = arith.constant 0 : index
    %c0_7 = arith.constant 0 : index
    %5 = vector.load %arg4[%c0_5, %c0_6, %c0_7] : memref<1x1x4xf32, #tpu.memory_space<vmem>>, vector<1x1x4xf32>
    %6 = vector.shape_cast %5 : vector<1x1x4xf32> to vector<1x4xf32>
    %7 = vector.broadcast %6 : vector<1x4xf32> to vector<128x4xf32>
    %8 = arith.addf %4, %7 : vector<128x4xf32>
    %9 = arith.truncf %8 : vector<128x4xf32> to vector<128x4xbf16>
    %c0_8 = arith.constant 0 : index
    %c0_9 = arith.constant 0 : index
    %c0_10 = arith.constant 0 : index
    %10 = vector.load %arg5[%c0_8, %c0_9, %c0_10] : memref<1x128x4xbf16, #tpu.memory_space<vmem>>, vector<1x128x4xbf16>
    %11 = vector.shape_cast %10 : vector<1x128x4xbf16> to vector<128x4xbf16>
    %12 = vector.shape_cast %9 : vector<128x4xbf16> to vector<1x128x4xbf16>
    tpu.vector_store %arg5[%c0_8, %c0_9, %c0_10], %12 {strides = array<i32>} : memref<1x128x4xbf16, #tpu.memory_space<vmem>>, vector<1x128x4xbf16>,
    return
  }
  func.func @transform_0(%arg0: i32, %arg1: i32) -> (i32, i32, i32) {
    %c0_i32 = arith.constant 0 : i32
    %c0_i32_0 = arith.constant 0 : i32
    return %arg0, %arg1, %c0_i32 : i32, i32, i32
  }
  func.func @transform_1(%arg0: i32, %arg1: i32) -> (i32, i32, i32) {
    %c0_i32 = arith.constant 0 : i32
    %c0_i32_0 = arith.constant 0 : i32
    %c0_i32_1 = arith.constant 0 : i32
    return %arg0, %c0_i32, %c0_i32_0 : i32, i32, i32
  }
  func.func @transform_2(%arg0: i32, %arg1: i32) -> (i32, i32, i32) {
    %c0_i32 = arith.constant 0 : i32
    %c0_i32_0 = arith.constant 0 : i32
    %c0_i32_1 = arith.constant 0 : i32
    return %arg0, %c0_i32, %c0_i32_0 : i32, i32, i32
  }
  func.func @transform_3(%arg0: i32, %arg1: i32) -> (i32, i32, i32) {
    %c0_i32 = arith.constant 0 : i32
    %c0_i32_0 = arith.constant 0 : i32
    return %arg0, %arg1, %c0_i32 : i32, i32, i32
  }
}

module attributes {stable_mosaic.version = 11 : i64} {
  func.func @_conv_mm_kernel(%arg0: i32, %arg1: i32, %arg2: memref<1x128x27xbf16, #tpu.memory_space<vmem>>, %arg3: memref<1x27x8xbf16, #tpu.memory_space<vmem>>, %arg4: memref<1x1x8xf32, #tpu.memory_space<vmem>>, %arg5: memref<1x128x8xbf16, #tpu.memory_space<vmem>>) attributes {dimension_semantics = [#tpu.dimension_semantics<parallel>, #tpu.dimension_semantics<parallel>], iteration_bounds = array<i64: 2, 1>, scalar_prefetch = 0 : i64, scratch_operands = 0 : i64, tpu.core_type = #tpu.core_type<tc>, window_params = [{transform_indices = @transform_0, window_bounds = array<i64: 1, 128, 27>}, {transform_indices = @transform_1, window_bounds = array<i64: 1, 27, 8>}, {transform_indices = @transform_2, window_bounds = array<i64: 1, 1, 8>}, {transform_indices = @transform_3, window_bounds = array<i64: 1, 128, 8>}]} {
    %c0 = arith.constant 0 : index
    %c0_0 = arith.constant 0 : index
    %c0_1 = arith.constant 0 : index
    %0 = vector.load %arg2[%c0, %c0_0, %c0_1] : memref<1x128x27xbf16, #tpu.memory_space<vmem>>, vector<1x128x27xbf16>
    %1 = vector.shape_cast %0 : vector<1x128x27xbf16> to vector<128x27xbf16>
    %c0_2 = arith.constant 0 : index
    %c0_3 = arith.constant 0 : index
    %c0_4 = arith.constant 0 : index
    %2 = vector.load %arg3[%c0_2, %c0_3, %c0_4] : memref<1x27x8xbf16, #tpu.memory_space<vmem>>, vector<1x27x8xbf16>
    %3 = vector.shape_cast %2 : vector<1x27x8xbf16> to vector<27x8xbf16>
    %cst = arith.constant dense<0.000000e+00> : vector<128x8xf32>
    %4 = tpu.matmul %1, %3, %cst {dimension_numbers = #tpu.dot_dimension_numbers<[1], [0], [0], [1], [0, 0, 1, 1], [], []>} : vector<128x27xbf16>, vector<27x8xbf16>, vector<128x8xf32> -> vector<128x8xf32>
    %c0_5 = arith.constant 0 : index
    %c0_6 = arith.constant 0 : index
    %c0_7 = arith.constant 0 : index
    %5 = vector.load %arg4[%c0_5, %c0_6, %c0_7] : memref<1x1x8xf32, #tpu.memory_space<vmem>>, vector<1x1x8xf32>
    %6 = vector.shape_cast %5 : vector<1x1x8xf32> to vector<1x8xf32>
    %7 = vector.broadcast %6 : vector<1x8xf32> to vector<128x8xf32>
    %8 = arith.addf %4, %7 : vector<128x8xf32>
    %9 = arith.truncf %8 : vector<128x8xf32> to vector<128x8xbf16>
    %c0_8 = arith.constant 0 : index
    %c0_9 = arith.constant 0 : index
    %c0_10 = arith.constant 0 : index
    %10 = vector.load %arg5[%c0_8, %c0_9, %c0_10] : memref<1x128x8xbf16, #tpu.memory_space<vmem>>, vector<1x128x8xbf16>
    %11 = vector.shape_cast %10 : vector<1x128x8xbf16> to vector<128x8xbf16>
    %12 = vector.shape_cast %9 : vector<128x8xbf16> to vector<1x128x8xbf16>
    tpu.vector_store %arg5[%c0_8, %c0_9, %c0_10], %12 {strides = array<i32>} : memref<1x128x8xbf16, #tpu.memory_space<vmem>>, vector<1x128x8xbf16>,
    return
  }
  func.func @transform_0(%arg0: i32, %arg1: i32) -> (i32, i32, i32) {
    %c0_i32 = arith.constant 0 : i32
    %c0_i32_0 = arith.constant 0 : i32
    return %arg0, %arg1, %c0_i32 : i32, i32, i32
  }
  func.func @transform_1(%arg0: i32, %arg1: i32) -> (i32, i32, i32) {
    %c0_i32 = arith.constant 0 : i32
    %c0_i32_0 = arith.constant 0 : i32
    %c0_i32_1 = arith.constant 0 : i32
    return %arg0, %c0_i32, %c0_i32_0 : i32, i32, i32
  }
  func.func @transform_2(%arg0: i32, %arg1: i32) -> (i32, i32, i32) {
    %c0_i32 = arith.constant 0 : i32
    %c0_i32_0 = arith.constant 0 : i32
    %c0_i32_1 = arith.constant 0 : i32
    return %arg0, %c0_i32, %c0_i32_0 : i32, i32, i32
  }
  func.func @transform_3(%arg0: i32, %arg1: i32) -> (i32, i32, i32) {
    %c0_i32 = arith.constant 0 : i32
    %c0_i32_0 = arith.constant 0 : i32
    return %arg0, %arg1, %c0_i32 : i32, i32, i32
  }
}

module attributes {stable_mosaic.version = 11 : i64} {
  func.func @_conv_mm_kernel(%arg0: i32, %arg1: i32, %arg2: memref<1x64x8xbf16, #tpu.memory_space<vmem>>, %arg3: memref<1x8x8xbf16, #tpu.memory_space<vmem>>, %arg4: memref<1x1x8xf32, #tpu.memory_space<vmem>>, %arg5: memref<1x64x8xf32, #tpu.memory_space<vmem>>) attributes {dimension_semantics = [#tpu.dimension_semantics<parallel>, #tpu.dimension_semantics<parallel>], iteration_bounds = array<i64: 2, 2>, scalar_prefetch = 0 : i64, scratch_operands = 0 : i64, tpu.core_type = #tpu.core_type<tc>, window_params = [{transform_indices = @transform_0, window_bounds = array<i64: 1, 64, 8>}, {transform_indices = @transform_1, window_bounds = array<i64: 1, 8, 8>}, {transform_indices = @transform_2, window_bounds = array<i64: 1, 1, 8>}, {transform_indices = @transform_3, window_bounds = array<i64: 1, 64, 8>}]} {
    %c0 = arith.constant 0 : index
    %c0_0 = arith.constant 0 : index
    %c0_1 = arith.constant 0 : index
    %0 = vector.load %arg2[%c0, %c0_0, %c0_1] : memref<1x64x8xbf16, #tpu.memory_space<vmem>>, vector<1x64x8xbf16>
    %1 = vector.shape_cast %0 : vector<1x64x8xbf16> to vector<64x8xbf16>
    %c0_2 = arith.constant 0 : index
    %c0_3 = arith.constant 0 : index
    %c0_4 = arith.constant 0 : index
    %2 = vector.load %arg3[%c0_2, %c0_3, %c0_4] : memref<1x8x8xbf16, #tpu.memory_space<vmem>>, vector<1x8x8xbf16>
    %3 = vector.shape_cast %2 : vector<1x8x8xbf16> to vector<8x8xbf16>
    %cst = arith.constant dense<0.000000e+00> : vector<64x8xf32>
    %4 = tpu.matmul %1, %3, %cst {dimension_numbers = #tpu.dot_dimension_numbers<[1], [0], [0], [1], [0, 0, 1, 1], [], []>} : vector<64x8xbf16>, vector<8x8xbf16>, vector<64x8xf32> -> vector<64x8xf32>
    %c0_5 = arith.constant 0 : index
    %c0_6 = arith.constant 0 : index
    %c0_7 = arith.constant 0 : index
    %5 = vector.load %arg4[%c0_5, %c0_6, %c0_7] : memref<1x1x8xf32, #tpu.memory_space<vmem>>, vector<1x1x8xf32>
    %6 = vector.shape_cast %5 : vector<1x1x8xf32> to vector<1x8xf32>
    %7 = vector.broadcast %6 : vector<1x8xf32> to vector<64x8xf32>
    %8 = arith.addf %4, %7 : vector<64x8xf32>
    %9 = arith.negf %8 : vector<64x8xf32>
    %10 = math.exp %9 : vector<64x8xf32>
    %cst_8 = arith.constant 1.000000e+00 : f32
    %11 = vector.broadcast %cst_8 : f32 to vector<64x8xf32>
    %12 = arith.addf %11, %10 : vector<64x8xf32>
    %13 = arith.divf %11, %12 : vector<64x8xf32>
    %14 = arith.mulf %8, %13 : vector<64x8xf32>
    %c0_9 = arith.constant 0 : index
    %c0_10 = arith.constant 0 : index
    %c0_11 = arith.constant 0 : index
    %15 = vector.load %arg5[%c0_9, %c0_10, %c0_11] : memref<1x64x8xf32, #tpu.memory_space<vmem>>, vector<1x64x8xf32>
    %16 = vector.shape_cast %15 : vector<1x64x8xf32> to vector<64x8xf32>
    %17 = vector.shape_cast %14 : vector<64x8xf32> to vector<1x64x8xf32>
    tpu.vector_store %arg5[%c0_9, %c0_10, %c0_11], %17 {strides = array<i32>} : memref<1x64x8xf32, #tpu.memory_space<vmem>>, vector<1x64x8xf32>,
    return
  }
  func.func @transform_0(%arg0: i32, %arg1: i32) -> (i32, i32, i32) {
    %c0_i32 = arith.constant 0 : i32
    %c0_i32_0 = arith.constant 0 : i32
    return %arg0, %arg1, %c0_i32 : i32, i32, i32
  }
  func.func @transform_1(%arg0: i32, %arg1: i32) -> (i32, i32, i32) {
    %c0_i32 = arith.constant 0 : i32
    %c0_i32_0 = arith.constant 0 : i32
    %c0_i32_1 = arith.constant 0 : i32
    return %arg0, %c0_i32, %c0_i32_0 : i32, i32, i32
  }
  func.func @transform_2(%arg0: i32, %arg1: i32) -> (i32, i32, i32) {
    %c0_i32 = arith.constant 0 : i32
    %c0_i32_0 = arith.constant 0 : i32
    %c0_i32_1 = arith.constant 0 : i32
    return %arg0, %c0_i32, %c0_i32_0 : i32, i32, i32
  }
  func.func @transform_3(%arg0: i32, %arg1: i32) -> (i32, i32, i32) {
    %c0_i32 = arith.constant 0 : i32
    %c0_i32_0 = arith.constant 0 : i32
    return %arg0, %arg1, %c0_i32 : i32, i32, i32
  }
}

module attributes {stable_mosaic.version = 11 : i64} {
  func.func @_conv_mm_kernel(%arg0: i32, %arg1: i32, %arg2: memref<1x64x36xbf16, #tpu.memory_space<vmem>>, %arg3: memref<1x36x8xbf16, #tpu.memory_space<vmem>>, %arg4: memref<1x1x8xf32, #tpu.memory_space<vmem>>, %arg5: memref<1x64x8xbf16, #tpu.memory_space<vmem>>) attributes {dimension_semantics = [#tpu.dimension_semantics<parallel>, #tpu.dimension_semantics<parallel>], iteration_bounds = array<i64: 2, 2>, scalar_prefetch = 0 : i64, scratch_operands = 0 : i64, tpu.core_type = #tpu.core_type<tc>, window_params = [{transform_indices = @transform_0, window_bounds = array<i64: 1, 64, 36>}, {transform_indices = @transform_1, window_bounds = array<i64: 1, 36, 8>}, {transform_indices = @transform_2, window_bounds = array<i64: 1, 1, 8>}, {transform_indices = @transform_3, window_bounds = array<i64: 1, 64, 8>}]} {
    %c0 = arith.constant 0 : index
    %c0_0 = arith.constant 0 : index
    %c0_1 = arith.constant 0 : index
    %0 = vector.load %arg2[%c0, %c0_0, %c0_1] : memref<1x64x36xbf16, #tpu.memory_space<vmem>>, vector<1x64x36xbf16>
    %1 = vector.shape_cast %0 : vector<1x64x36xbf16> to vector<64x36xbf16>
    %c0_2 = arith.constant 0 : index
    %c0_3 = arith.constant 0 : index
    %c0_4 = arith.constant 0 : index
    %2 = vector.load %arg3[%c0_2, %c0_3, %c0_4] : memref<1x36x8xbf16, #tpu.memory_space<vmem>>, vector<1x36x8xbf16>
    %3 = vector.shape_cast %2 : vector<1x36x8xbf16> to vector<36x8xbf16>
    %cst = arith.constant dense<0.000000e+00> : vector<64x8xf32>
    %4 = tpu.matmul %1, %3, %cst {dimension_numbers = #tpu.dot_dimension_numbers<[1], [0], [0], [1], [0, 0, 1, 1], [], []>} : vector<64x36xbf16>, vector<36x8xbf16>, vector<64x8xf32> -> vector<64x8xf32>
    %c0_5 = arith.constant 0 : index
    %c0_6 = arith.constant 0 : index
    %c0_7 = arith.constant 0 : index
    %5 = vector.load %arg4[%c0_5, %c0_6, %c0_7] : memref<1x1x8xf32, #tpu.memory_space<vmem>>, vector<1x1x8xf32>
    %6 = vector.shape_cast %5 : vector<1x1x8xf32> to vector<1x8xf32>
    %7 = vector.broadcast %6 : vector<1x8xf32> to vector<64x8xf32>
    %8 = arith.addf %4, %7 : vector<64x8xf32>
    %9 = arith.truncf %8 : vector<64x8xf32> to vector<64x8xbf16>
    %c0_8 = arith.constant 0 : index
    %c0_9 = arith.constant 0 : index
    %c0_10 = arith.constant 0 : index
    %10 = vector.load %arg5[%c0_8, %c0_9, %c0_10] : memref<1x64x8xbf16, #tpu.memory_space<vmem>>, vector<1x64x8xbf16>
    %11 = vector.shape_cast %10 : vector<1x64x8xbf16> to vector<64x8xbf16>
    %12 = vector.shape_cast %9 : vector<64x8xbf16> to vector<1x64x8xbf16>
    tpu.vector_store %arg5[%c0_8, %c0_9, %c0_10], %12 {strides = array<i32>} : memref<1x64x8xbf16, #tpu.memory_space<vmem>>, vector<1x64x8xbf16>,
    return
  }
  func.func @transform_0(%arg0: i32, %arg1: i32) -> (i32, i32, i32) {
    %c0_i32 = arith.constant 0 : i32
    %c0_i32_0 = arith.constant 0 : i32
    return %arg0, %arg1, %c0_i32 : i32, i32, i32
  }
  func.func @transform_1(%arg0: i32, %arg1: i32) -> (i32, i32, i32) {
    %c0_i32 = arith.constant 0 : i32
    %c0_i32_0 = arith.constant 0 : i32
    %c0_i32_1 = arith.constant 0 : i32
    return %arg0, %c0_i32, %c0_i32_0 : i32, i32, i32
  }
  func.func @transform_2(%arg0: i32, %arg1: i32) -> (i32, i32, i32) {
    %c0_i32 = arith.constant 0 : i32
    %c0_i32_0 = arith.constant 0 : i32
    %c0_i32_1 = arith.constant 0 : i32
    return %arg0, %c0_i32, %c0_i32_0 : i32, i32, i32
  }
  func.func @transform_3(%arg0: i32, %arg1: i32) -> (i32, i32, i32) {
    %c0_i32 = arith.constant 0 : i32
    %c0_i32_0 = arith.constant 0 : i32
    return %arg0, %arg1, %c0_i32 : i32, i32, i32
  }
}

</mosaic_0001>

<llo_original>
// kernel: fwd.5
$region0: #{fwd.5}
  #allocation0 [shape = 'u32[]', space=smem, size = 0x4, offset = 0x4, fixed_abs, tag = 'smem constant byte address 0x4 - core index']
  #allocation1 [shape = 'u32[72,128]{1,0:T(1,128)}', space=vmem, size = 0x9000, scoped, tag = 'internal scratch']
  %s0 = inlined_call_operand.vmem [shape: bf16[2,128,8], index: 0, kind: input, shape index: {}]
  %s1 = inlined_call_operand.vmem [shape: bf16[2,8,4], index: 1, kind: input, shape index: {}]
  %s2 = inlined_call_operand.vmem [shape: f32[2,1,4], index: 2, kind: input, shape index: {}]
  %s3 = inlined_call_operand.vmem [shape: bf16[2,128,4], index: 3, kind: output, shape index: {}]
  %s4 = sld [smem:[#allocation0]]
  $region45: #{fwd.5} parent=0
    _
  %s6 = ssub.s32 1, %s4
  %s7 = scalar_select 0, %s6, %s4
  loop: start=0, step=1, limit=4
  $region2: #{fwd.5} parent=0 // loop_pre_header
    _
  $region3: #{fwd.5} parent=0 // loop_header
    %s9 = sphi 0, %s13
    %p10 = scmp.ge.s32.totalorder %s9, 4
    %s16 = sphi 0, %s28
    %s17 = sphi 0, %s24
    %s18 = sphi 0, %s16
    %s19 = sphi 0, %s17
    %s20 = sphi 0, %s18
    %s21 = sphi 0, %s19
    %s33 = sphi 0, %s35
    %s36 = sphi 0, %s33
    %s37 = sphi 0, %s36
    %s53 = sphi 0, %s37
    %s59 = sphi 0, %s61
    %s62 = sphi 0, %s59
    %s63 = sphi 0, %s62
    %s79 = sphi 0, %s63
    %s85 = sphi 0, %s87
    %s88 = sphi 0, %s85
    %s89 = sphi 0, %s88
    %s105 = sphi 0, %s89
    %s113 = sphi 0, %s115
    %s116 = sphi 0, %s113
    %s117 = sphi 0, %s116
    %s133 = sphi 0, %s117
  $region4: #{fwd.5} parent=0 // loop_header_branch
    %12 = sbr.rel (%p10) target = $region8
  $region5: #{fwd.5} parent=0 // loop_body
    %s14 = ssub.s32 %s9, 1
    %s15 = ssub.s32 %s9, 2
    %s22 = sadd.s32 1, %s17
    %p23 = scmp.ge.s32.totalorder %s22, 1
    %s24 = scalar_select %p23, 0, %s22
    %s25 = sadd.s32 1, %s16
    %s26 = scalar_select %p23, %s25, %s16
    %p27 = scmp.ge.s32.totalorder %s26, 2
    %s28 = scalar_select %p27, 0, %s26
    %s29 = ssub.s32 %s16, %s28
    %s30 = ssub.s32 %s17, %s24
    %s31 = sor.u32 %s29, %s30
    %p32 = scmp.eq.s32.totalorder %s31, 0
    %s34 = sadd.s32 %s33, 1
    %s35 = scalar_select %p32, %s33, %s34
    %p38 = pneg %p32
    %p39 = scmp.eq.s32.totalorder %s9, 1
    %p40 = por %p38, %p39
    %p41 = scmp.ne.s32.totalorder %s33, %s36
    %p42 = scmp.eq.s32.totalorder %s9, 0
    %p43 = por %p41, %p42
    %p44 = scmp.ne.s32.totalorder %s33, %s36
    %p45 = scmp.eq.s32.totalorder %s14, 1
    %p46 = por %p44, %p45
    %p47 = scmp.ne.s32.totalorder %s36, %s37
    %p48 = scmp.eq.s32.totalorder %s14, 0
    %p49 = por %p47, %p48
    %p50 = scmp.ne.s32.totalorder %s36, %s37
    %p51 = scmp.eq.s32.totalorder %s15, 1
    %p52 = por %p50, %p51
    %p54 = scmp.ne.s32.totalorder %s37, %s53
    %p55 = scmp.eq.s32.totalorder %s15, 0
    %p56 = por %p54, %p55
    %s57 = ssub.s32 %s16, %s28
    %p58 = scmp.eq.s32.totalorder %s57, 0
    %s60 = sadd.s32 %s59, 1
    %s61 = scalar_select %p58, %s59, %s60
    %p64 = pneg %p58
    %p65 = scmp.eq.s32.totalorder %s9, 1
    %p66 = por %p64, %p65
    %p67 = scmp.ne.s32.totalorder %s59, %s62
    %p68 = scmp.eq.s32.totalorder %s9, 0
    %p69 = por %p67, %p68
    %p70 = scmp.ne.s32.totalorder %s59, %s62
    %p71 = scmp.eq.s32.totalorder %s14, 1
    %p72 = por %p70, %p71
    %p73 = scmp.ne.s32.totalorder %s62, %s63
    %p74 = scmp.eq.s32.totalorder %s14, 0
    %p75 = por %p73, %p74
    %p76 = scmp.ne.s32.totalorder %s62, %s63
    %p77 = scmp.eq.s32.totalorder %s15, 1
    %p78 = por %p76, %p77
    %p80 = scmp.ne.s32.totalorder %s63, %s79
    %p81 = scmp.eq.s32.totalorder %s15, 0
    %p82 = por %p80, %p81
    %s83 = ssub.s32 %s16, %s28
    %p84 = scmp.eq.s32.totalorder %s83, 0
    %s86 = sadd.s32 %s85, 1
    %s87 = scalar_select %p84, %s85, %s86
    %p90 = pneg %p84
    %p91 = scmp.eq.s32.totalorder %s9, 1
    %p92 = por %p90, %p91
    %p93 = scmp.ne.s32.totalorder %s85, %s88
    %p94 = scmp.eq.s32.totalorder %s9, 0
    %p95 = por %p93, %p94
    %p96 = scmp.ne.s32.totalorder %s85, %s88
    %p97 = scmp.eq.s32.totalorder %s14, 1
    %p98 = por %p96, %p97
    %p99 = scmp.ne.s32.totalorder %s88, %s89
    %p100 = scmp.eq.s32.totalorder %s14, 0
    %p101 = por %p99, %p100
    %p102 = scmp.ne.s32.totalorder %s88, %s89
    %p103 = scmp.eq.s32.totalorder %s15, 1
    %p104 = por %p102, %p103
    %p106 = scmp.ne.s32.totalorder %s89, %s105
    %p107 = scmp.eq.s32.totalorder %s15, 0
    %p108 = por %p106, %p107
    %s109 = ssub.s32 %s16, %s28
    %s110 = ssub.s32 %s17, %s24
    %s111 = sor.u32 %s109, %s110
    %p112 = scmp.eq.s32.totalorder %s111, 0
    %s114 = sadd.s32 %s113, 1
    %s115 = scalar_select %p112, %s113, %s114
    %p118 = pneg %p112
    %p119 = scmp.eq.s32.totalorder %s9, 1
    %p120 = por %p118, %p119
    %p121 = scmp.ne.s32.totalorder %s113, %s116
    %p122 = scmp.eq.s32.totalorder %s9, 0
    %p123 = por %p121, %p122
    %p124 = scmp.ne.s32.totalorder %s113, %s116
    %p125 = scmp.eq.s32.totalorder %s14, 1
    %p126 = por %p124, %p125
    %p127 = scmp.ne.s32.totalorder %s116, %s117
    %p128 = scmp.eq.s32.totalorder %s14, 0
    %p129 = por %p127, %p128
    %p130 = scmp.ne.s32.totalorder %s116, %s117
    %p131 = scmp.eq.s32.totalorder %s15, 1
    %p132 = por %p130, %p131
    %p134 = scmp.ne.s32.totalorder %s117, %s133
    %p135 = scmp.eq.s32.totalorder %s15, 0
    %p136 = por %p134, %p135
    %p137 = scmp.le.s32.totalorder 1, %s9
    %p138 = scmp.lt.s32.totalorder %s9, 3
    %p139 = pnand %p137, %p138
    %p140 = pneg %p139
    // Predicated region
    $region9: #{fwd.5} parent=5 // pred_check
      _
    $region10: #{fwd.5} parent=5 // pred_check_branch
      %142 = sbr.rel (%p139) target = $region12
    $region11: #{fwd.5} parent=5 // pred_region
      %s143 = ssub.s32 %s9, 1
    $region12: #{fwd.5} parent=5 // pred_fallthru
      _
    %p144 = scmp.lt.s32.totalorder %s9, 2
    // Predicated region
    $region13: #{fwd.5} parent=5 // pred_check
      %p145 = pneg %p144
    $region14: #{fwd.5} parent=5 // pred_check_branch
      %147 = sbr.rel (%p145) target = $region16
    $region15: #{fwd.5} parent=5 // pred_region
      // Predicated region
      $region17: #{fwd.5} parent=15 // pred_check
        %p148 = pneg %p43
      $region18: #{fwd.5} parent=15 // pred_check_branch
        %150 = sbr.rel (%p148) target = $region20
      $region19: #{fwd.5} parent=15 // pred_region
        %s151 = smul.u32 16, %s17
        %p152 = scmp.lt.s32.totalorder %s16, 1
        %s153 = scalar_select %p152, %s16, 1
        %p154 = scmp.lt.s32.totalorder %s151, 15
        %s155 = scalar_select %p154, %s151, 15
        %s156 = smul.addr %s153, 16
        %s157 = sadd.s32 %s155, %s156
        %s158 = smul.addr %s157, 4
        %s159 = scalar_lea.vmem %s0, %s158
        %s160 = smul.u32 16, %s17
      $region20: #{fwd.5} parent=15 // pred_fallthru
        _
      // Predicated region
      $region21: #{fwd.5} parent=15 // pred_check
        %p161 = pneg %p69
      $region22: #{fwd.5} parent=15 // pred_check_branch
        %163 = sbr.rel (%p161) target = $region24
      $region23: #{fwd.5} parent=15 // pred_region
        %p164 = scmp.lt.s32.totalorder %s16, 1
        %s165 = scalar_select %p164, %s16, 1
        %s166 = smul.addr %s165, 4
        %s167 = scalar_lea.vmem %s1, %s166
      $region24: #{fwd.5} parent=15 // pred_fallthru
        _
      // Predicated region
      $region25: #{fwd.5} parent=15 // pred_check
        %p168 = pneg %p95
      $region26: #{fwd.5} parent=15 // pred_check_branch
        %170 = sbr.rel (%p168) target = $region28
      $region27: #{fwd.5} parent=15 // pred_region
        %p171 = scmp.lt.s32.totalorder %s16, 1
        %s172 = scalar_select %p171, %s16, 1
        %s173 = scalar_lea.vmem %s2, %s172
      $region28: #{fwd.5} parent=15 // pred_fallthru
        _
    $region16: #{fwd.5} parent=5 // pred_fallthru
      _
    %p174 = scmp.le.s32.totalorder 1, %s9
    %p175 = scmp.lt.s32.totalorder %s9, 3
    %p176 = pnand %p174, %p175
    %p177 = pneg %p176
    // Predicated region
    $region29: #{fwd.5} parent=5 // pred_check
      _
    $region30: #{fwd.5} parent=5 // pred_check_branch
      %179 = sbr.rel (%p176) target = $region32
    $region31: #{fwd.5} parent=5 // pred_region
      %s180 = ssub.s32 %s9, 1
      %s181 = smul.u32 16, %s19
      %p182 = scmp.lt.s32.totalorder %s18, 1
      %s183 = scalar_select %p182, %s18, 1
      %p184 = scmp.lt.s32.totalorder %s181, 15
      %s185 = scalar_select %p184, %s181, 15
      %s186 = smul.addr %s183, 16
      %s187 = sadd.s32 %s185, %s186
      %s188 = smul.addr %s187, 4
      %s189 = scalar_lea.vmem %s0, %s188
      %p190 = pneg %p49
      %p191 = pneg %p46
      %p192 = scmp.lt.s32.totalorder %s18, 1
      %s193 = scalar_select %p192, %s18, 1
      %s194 = smul.addr %s193, 4
      %s195 = scalar_lea.vmem %s1, %s194
      %p196 = pneg %p75
      %p197 = pneg %p72
      %p198 = scmp.lt.s32.totalorder %s18, 1
      %s199 = scalar_select %p198, %s18, 1
      %s200 = scalar_lea.vmem %s2, %s199
      %p201 = pneg %p101
      %p202 = pneg %p98
      %p203 = pneg %p129
      %p204 = pneg %p126
      %s205 = smul.u32 16, %s19
      %p206 = scmp.lt.s32.totalorder %s18, 1
      %s207 = scalar_select %p206, %s18, 1
      %p208 = scmp.lt.s32.totalorder %s205, 15
      %s209 = scalar_select %p208, %s205, 15
      %s210 = smul.addr %s207, 16
      %s211 = sadd.s32 %s209, %s210
      %s212 = smul.addr %s211, 4
      %s213 = scalar_lea.vmem %s3, %s212
      %s214 = smul.u32 16, %s19
      %p215 = scmp.lt.s32.totalorder %s18, 1
      %s216 = scalar_select %p215, %s18, 1
      %p217 = scmp.lt.s32.totalorder %s214, 15
      %s218 = scalar_select %p217, %s214, 15
      %s219 = smul.addr %s216, 16
      %s220 = sadd.s32 %s218, %s219
      %s221 = smul.addr %s220, 4
      %s222 = scalar_lea.vmem %s0, %s221
      %s223 = smul.u32 16, %s19
      %p224 = scmp.lt.s32.totalorder %s18, 1
      %s225 = scalar_select %p224, %s18, 1
      %s226 = smul.addr %s225, 4
      %s227 = scalar_lea.vmem %s1, %s226
      %p228 = scmp.lt.s32.totalorder %s18, 1
      %s229 = scalar_select %p228, %s18, 1
      %s230 = scalar_lea.vmem %s2, %s229
      %s231 = smul.u32 16, %s19
      %p232 = scmp.lt.s32.totalorder %s18, 1
      %s233 = scalar_select %p232, %s18, 1
      %p234 = scmp.lt.s32.totalorder %s231, 15
      %s235 = scalar_select %p234, %s231, 15
      %s236 = smul.addr %s233, 16
      %s237 = sadd.s32 %s235, %s236
      %s238 = smul.addr %s237, 4
      %s239 = scalar_lea.vmem %s3, %s238
      %s240 = smul.u32 16, %s19
      %v242 = vld [vmem:[%s222] sm:$0xf]
      %v243 = vld [vmem:[%s222 + $0x4] sm:$0xf]
      %v244 = vld [vmem:[%s222 + $0x8] sm:$0xf]
      %v245 = vld [vmem:[%s222 + $0xc] sm:$0xf]
      %v246 = vld [vmem:[%s222 + $0x10] sm:$0xf]
      %v247 = vld [vmem:[%s222 + $0x14] sm:$0xf]
      %v248 = vld [vmem:[%s222 + $0x18] sm:$0xf]
      %v249 = vld [vmem:[%s222 + $0x1c] sm:$0xf]
      %v250 = vld [vmem:[%s222 + $0x20] sm:$0xf]
      %v251 = vld [vmem:[%s222 + $0x24] sm:$0xf]
      %v252 = vld [vmem:[%s222 + $0x28] sm:$0xf]
      %v253 = vld [vmem:[%s222 + $0x2c] sm:$0xf]
      %v254 = vld [vmem:[%s222 + $0x30] sm:$0xf]
      %v255 = vld [vmem:[%s222 + $0x34] sm:$0xf]
      %v256 = vld [vmem:[%s222 + $0x38] sm:$0xf]
      %v257 = vld [vmem:[%s222 + $0x3c] sm:$0xf]
      %v258 = vld [vmem:[%s227] sm:$0xf]
      %v259 = vld [vmem:[%s230] sm:$0x1]
      %v261 = vperm.slane %v259, 0
      %v279 = vunpack.c.l.b16 %v242
      %v280 = vunpack.c.l.b16 %v243
      %v281 = vunpack.c.l.b16 %v244
      %v282 = vunpack.c.l.b16 %v245
      %v283 = vunpack.c.l.b16 %v246
      %v284 = vunpack.c.l.b16 %v247
      %v285 = vunpack.c.l.b16 %v248
      %v286 = vunpack.c.l.b16 %v249
      %v287 = vunpack.c.l.b16 %v250
      %v288 = vunpack.c.l.b16 %v251
      %v289 = vunpack.c.l.b16 %v252
      %v290 = vunpack.c.l.b16 %v253
      %v291 = vunpack.c.l.b16 %v254
      %v292 = vunpack.c.l.b16 %v255
      %v293 = vunpack.c.l.b16 %v256
      %v294 = vunpack.c.l.b16 %v257
      %v295 = vpack.c.b16 %v280, %v279
      %v296 = vpack.c.b16 %v282, %v281
      %v297 = vpack.c.b16 %v284, %v283
      %v298 = vpack.c.b16 %v286, %v285
      %v299 = vpack.c.b16 %v288, %v287
      %v300 = vpack.c.b16 %v290, %v289
      %v301 = vpack.c.b16 %v292, %v291
      %v302 = vpack.c.b16 %v294, %v293
      %vm303 = vcmask 64512
      %v305 = vsel %vm303, %v295, 0
      %v308 = vsel %vm303, %v296, 0
      %v311 = vsel %vm303, %v297, 0
      %v314 = vsel %vm303, %v298, 0
      %v317 = vsel %vm303, %v299, 0
      %v320 = vsel %vm303, %v300, 0
      %v323 = vsel %vm303, %v301, 0
      %v326 = vsel %vm303, %v302, 0
      %vm328 = vcmask 1043456
      %v330 = vsel %vm328, %v258, 0
      %332 = vmatpush.bf16.msra.mxu0 0
      %333 = vmatpush.bf16.msra.mxu0 0
      %334 = vmatpush.bf16.msra.mxu0 0
      %335 = vmatpush.bf16.msra.mxu0 0
      %336 = vmatpush.bf16.msra.mxu0 0
      %337 = vmatpush.bf16.msra.mxu0 0
      %338 = vmatpush.bf16.msra.mxu0 0
      %339 = vmatpush.bf16.msra.mxu0 %v330
      %340 = vmatmul.bf16.gmra.mxu0 %v305
      %v341 = vpop.f32.mrf.mxu0
      %v342 = vadd.f32 %v261, %v341
      %v343 = vpop.f32.mrf.mxu0
      %v344 = vadd.f32 %v261, %v343
      %345 = vmatmul.bf16.gmra.mxu0 %v308
      %v346 = vpop.f32.mrf.mxu0
      %v347 = vadd.f32 %v261, %v346
      %v348 = vpop.f32.mrf.mxu0
      %v349 = vadd.f32 %v261, %v348
      %350 = vmatmul.bf16.gmra.mxu0 %v311
      %v351 = vpop.f32.mrf.mxu0
      %v352 = vadd.f32 %v261, %v351
      %v353 = vpop.f32.mrf.mxu0
      %v354 = vadd.f32 %v261, %v353
      %355 = vmatmul.bf16.gmra.mxu0 %v314
      %v356 = vpop.f32.mrf.mxu0
      %v357 = vadd.f32 %v261, %v356
      %v358 = vpop.f32.mrf.mxu0
      %v359 = vadd.f32 %v261, %v358
      %360 = vmatmul.bf16.gmra.mxu0 %v317
      %v361 = vpop.f32.mrf.mxu0
      %v362 = vadd.f32 %v261, %v361
      %v363 = vpop.f32.mrf.mxu0
      %v364 = vadd.f32 %v261, %v363
      %365 = vmatmul.bf16.gmra.mxu0 %v320
      %v366 = vpop.f32.mrf.mxu0
      %v367 = vadd.f32 %v261, %v366
      %v368 = vpop.f32.mrf.mxu0
      %v369 = vadd.f32 %v261, %v368
      %370 = vmatmul.bf16.gmra.mxu0 %v323
      %v371 = vpop.f32.mrf.mxu0
      %v372 = vadd.f32 %v261, %v371
      %v373 = vpop.f32.mrf.mxu0
      %v374 = vadd.f32 %v261, %v373
      %375 = vmatmul.bf16.gmra.mxu0 %v326
      %v376 = vpop.f32.mrf.mxu0
      %v377 = vadd.f32 %v261, %v376
      %v378 = vpop.f32.mrf.mxu0
      %v379 = vadd.f32 %v261, %v378
      %380 = vdwg.mxu0
      %v381 = vpack.c.bf16 %v342, %v342
      %v382 = vpack.c.bf16 %v344, %v344
      %v383 = vpack.c.bf16 %v347, %v347
      %v384 = vpack.c.bf16 %v349, %v349
      %v385 = vpack.c.bf16 %v352, %v352
      %v386 = vpack.c.bf16 %v354, %v354
      %v387 = vpack.c.bf16 %v357, %v357
      %v388 = vpack.c.bf16 %v359, %v359
      %v389 = vpack.c.bf16 %v362, %v362
      %v390 = vpack.c.bf16 %v364, %v364
      %v391 = vpack.c.bf16 %v367, %v367
      %v392 = vpack.c.bf16 %v369, %v369
      %v393 = vpack.c.bf16 %v372, %v372
      %v394 = vpack.c.bf16 %v374, %v374
      %v395 = vpack.c.bf16 %v377, %v377
      %v396 = vpack.c.bf16 %v379, %v379
      %vm397 = vcmask 27648
      %398 = vst.msk [vmem:[%s239] sm:$0xf] %vm397, %v381
      %399 = vst.msk [vmem:[%s239 + $0x4] sm:$0xf] %vm397, %v382
      %400 = vst.msk [vmem:[%s239 + $0x8] sm:$0xf] %vm397, %v383
      %401 = vst.msk [vmem:[%s239 + $0xc] sm:$0xf] %vm397, %v384
      %402 = vst.msk [vmem:[%s239 + $0x10] sm:$0xf] %vm397, %v385
      %403 = vst.msk [vmem:[%s239 + $0x14] sm:$0xf] %vm397, %v386
      %404 = vst.msk [vmem:[%s239 + $0x18] sm:$0xf] %vm397, %v387
      %405 = vst.msk [vmem:[%s239 + $0x1c] sm:$0xf] %vm397, %v388
      %406 = vst.msk [vmem:[%s239 + $0x20] sm:$0xf] %vm397, %v389
      %407 = vst.msk [vmem:[%s239 + $0x24] sm:$0xf] %vm397, %v390
      %408 = vst.msk [vmem:[%s239 + $0x28] sm:$0xf] %vm397, %v391
      %409 = vst.msk [vmem:[%s239 + $0x2c] sm:$0xf] %vm397, %v392
      %410 = vst.msk [vmem:[%s239 + $0x30] sm:$0xf] %vm397, %v393
      %411 = vst.msk [vmem:[%s239 + $0x34] sm:$0xf] %vm397, %v394
      %412 = vst.msk [vmem:[%s239 + $0x38] sm:$0xf] %vm397, %v395
      %413 = vst.msk [vmem:[%s239 + $0x3c] sm:$0xf] %vm397, %v396
      %s414 = smul.u32 16, %s19
      %p415 = scmp.lt.s32.totalorder %s18, 1
      %s416 = scalar_select %p415, %s18, 1
      %p417 = scmp.lt.s32.totalorder %s414, 15
      %s418 = scalar_select %p417, %s414, 15
      %s419 = smul.addr %s416, 16
      %s420 = sadd.s32 %s418, %s419
      %s421 = smul.addr %s420, 4
      %s422 = scalar_lea.vmem %s3, %s421
      // Predicated region
      $region33: #{fwd.5} parent=31 // pred_check
        %p423 = pneg %p126
      $region34: #{fwd.5} parent=31 // pred_check_branch
        %425 = sbr.rel (%p423) target = $region36
      $region35: #{fwd.5} parent=31 // pred_region
        %s426 = smul.u32 16, %s19
      $region36: #{fwd.5} parent=31 // pred_fallthru
        _
    $region32: #{fwd.5} parent=5 // pred_fallthru
      _
    %p427 = scmp.le.s32.totalorder 2, %s9
    // Predicated region
    $region37: #{fwd.5} parent=5 // pred_check
      %p428 = pneg %p427
    $region38: #{fwd.5} parent=5 // pred_check_branch
      %430 = sbr.rel (%p428) target = $region40
    $region39: #{fwd.5} parent=5 // pred_region
      %s431 = ssub.s32 %s9, 2
      // Predicated region
      $region41: #{fwd.5} parent=39 // pred_check
        %p432 = pneg %p132
      $region42: #{fwd.5} parent=39 // pred_check_branch
        %434 = sbr.rel (%p432) target = $region44
      $region43: #{fwd.5} parent=39 // pred_region
        %s435 = smul.u32 16, %s21
        %p436 = scmp.lt.s32.totalorder %s20, 1
        %s437 = scalar_select %p436, %s20, 1
        %p438 = scmp.lt.s32.totalorder %s435, 15
        %s439 = scalar_select %p438, %s435, 15
        %s440 = smul.addr %s437, 16
        %s441 = sadd.s32 %s439, %s440
        %s442 = smul.addr %s441, 4
        %s443 = scalar_lea.vmem %s3, %s442
      $region44: #{fwd.5} parent=39 // pred_fallthru
        _
    $region40: #{fwd.5} parent=5 // pred_fallthru
      _
  $region6: #{fwd.5} parent=0 // loop_footer
    %s13 = sadd.s32 1, %s9
  $region7: #{fwd.5} parent=0 // loop_footer_branch
    %8 = sbr.rel target = $region3
  $region8: #{fwd.5} parent=0 // loop_exit
    _

// kernel: fwd.4
$region0: #{fwd.4}
  #allocation0 [shape = 'u32[]', space=smem, size = 0x4, offset = 0x4, fixed_abs, tag = 'smem constant byte address 0x4 - core index']
  #allocation1 [shape = 'u32[72,128]{1,0:T(1,128)}', space=vmem, size = 0x9000, scoped, tag = 'internal scratch']
  %s0 = inlined_call_operand.vmem [shape: bf16[2,128,27], index: 0, kind: input, shape index: {}]
  %s1 = inlined_call_operand.vmem [shape: bf16[2,27,8], index: 1, kind: input, shape index: {}]
  %s2 = inlined_call_operand.vmem [shape: f32[2,1,8], index: 2, kind: input, shape index: {}]
  %s3 = inlined_call_operand.vmem [shape: bf16[2,128,8], index: 3, kind: output, shape index: {}]
  %s4 = sld [smem:[#allocation0]]
  $region45: #{fwd.4} parent=0
    _
  %s6 = ssub.s32 1, %s4
  %s7 = scalar_select 0, %s6, %s4
  loop: start=0, step=1, limit=4
  $region2: #{fwd.4} parent=0 // loop_pre_header
    _
  $region3: #{fwd.4} parent=0 // loop_header
    %s9 = sphi 0, %s13
    %p10 = scmp.ge.s32.totalorder %s9, 4
    %s16 = sphi 0, %s28
    %s17 = sphi 0, %s24
    %s18 = sphi 0, %s16
    %s19 = sphi 0, %s17
    %s20 = sphi 0, %s18
    %s21 = sphi 0, %s19
    %s33 = sphi 0, %s35
    %s36 = sphi 0, %s33
    %s37 = sphi 0, %s36
    %s53 = sphi 0, %s37
    %s59 = sphi 0, %s61
    %s62 = sphi 0, %s59
    %s63 = sphi 0, %s62
    %s79 = sphi 0, %s63
    %s85 = sphi 0, %s87
    %s88 = sphi 0, %s85
    %s89 = sphi 0, %s88
    %s105 = sphi 0, %s89
    %s113 = sphi 0, %s115
    %s116 = sphi 0, %s113
    %s117 = sphi 0, %s116
    %s133 = sphi 0, %s117
  $region4: #{fwd.4} parent=0 // loop_header_branch
    %12 = sbr.rel (%p10) target = $region8
  $region5: #{fwd.4} parent=0 // loop_body
    %s14 = ssub.s32 %s9, 1
    %s15 = ssub.s32 %s9, 2
    %s22 = sadd.s32 1, %s17
    %p23 = scmp.ge.s32.totalorder %s22, 1
    %s24 = scalar_select %p23, 0, %s22
    %s25 = sadd.s32 1, %s16
    %s26 = scalar_select %p23, %s25, %s16
    %p27 = scmp.ge.s32.totalorder %s26, 2
    %s28 = scalar_select %p27, 0, %s26
    %s29 = ssub.s32 %s16, %s28
    %s30 = ssub.s32 %s17, %s24
    %s31 = sor.u32 %s29, %s30
    %p32 = scmp.eq.s32.totalorder %s31, 0
    %s34 = sadd.s32 %s33, 1
    %s35 = scalar_select %p32, %s33, %s34
    %p38 = pneg %p32
    %p39 = scmp.eq.s32.totalorder %s9, 1
    %p40 = por %p38, %p39
    %p41 = scmp.ne.s32.totalorder %s33, %s36
    %p42 = scmp.eq.s32.totalorder %s9, 0
    %p43 = por %p41, %p42
    %p44 = scmp.ne.s32.totalorder %s33, %s36
    %p45 = scmp.eq.s32.totalorder %s14, 1
    %p46 = por %p44, %p45
    %p47 = scmp.ne.s32.totalorder %s36, %s37
    %p48 = scmp.eq.s32.totalorder %s14, 0
    %p49 = por %p47, %p48
    %p50 = scmp.ne.s32.totalorder %s36, %s37
    %p51 = scmp.eq.s32.totalorder %s15, 1
    %p52 = por %p50, %p51
    %p54 = scmp.ne.s32.totalorder %s37, %s53
    %p55 = scmp.eq.s32.totalorder %s15, 0
    %p56 = por %p54, %p55
    %s57 = ssub.s32 %s16, %s28
    %p58 = scmp.eq.s32.totalorder %s57, 0
    %s60 = sadd.s32 %s59, 1
    %s61 = scalar_select %p58, %s59, %s60
    %p64 = pneg %p58
    %p65 = scmp.eq.s32.totalorder %s9, 1
    %p66 = por %p64, %p65
    %p67 = scmp.ne.s32.totalorder %s59, %s62
    %p68 = scmp.eq.s32.totalorder %s9, 0
    %p69 = por %p67, %p68
    %p70 = scmp.ne.s32.totalorder %s59, %s62
    %p71 = scmp.eq.s32.totalorder %s14, 1
    %p72 = por %p70, %p71
    %p73 = scmp.ne.s32.totalorder %s62, %s63
    %p74 = scmp.eq.s32.totalorder %s14, 0
    %p75 = por %p73, %p74
    %p76 = scmp.ne.s32.totalorder %s62, %s63
    %p77 = scmp.eq.s32.totalorder %s15, 1
    %p78 = por %p76, %p77
    %p80 = scmp.ne.s32.totalorder %s63, %s79
    %p81 = scmp.eq.s32.totalorder %s15, 0
    %p82 = por %p80, %p81
    %s83 = ssub.s32 %s16, %s28
    %p84 = scmp.eq.s32.totalorder %s83, 0
    %s86 = sadd.s32 %s85, 1
    %s87 = scalar_select %p84, %s85, %s86
    %p90 = pneg %p84
    %p91 = scmp.eq.s32.totalorder %s9, 1
    %p92 = por %p90, %p91
    %p93 = scmp.ne.s32.totalorder %s85, %s88
    %p94 = scmp.eq.s32.totalorder %s9, 0
    %p95 = por %p93, %p94
    %p96 = scmp.ne.s32.totalorder %s85, %s88
    %p97 = scmp.eq.s32.totalorder %s14, 1
    %p98 = por %p96, %p97
    %p99 = scmp.ne.s32.totalorder %s88, %s89
    %p100 = scmp.eq.s32.totalorder %s14, 0
    %p101 = por %p99, %p100
    %p102 = scmp.ne.s32.totalorder %s88, %s89
    %p103 = scmp.eq.s32.totalorder %s15, 1
    %p104 = por %p102, %p103
    %p106 = scmp.ne.s32.totalorder %s89, %s105
    %p107 = scmp.eq.s32.totalorder %s15, 0
    %p108 = por %p106, %p107
    %s109 = ssub.s32 %s16, %s28
    %s110 = ssub.s32 %s17, %s24
    %s111 = sor.u32 %s109, %s110
    %p112 = scmp.eq.s32.totalorder %s111, 0
    %s114 = sadd.s32 %s113, 1
    %s115 = scalar_select %p112, %s113, %s114
    %p118 = pneg %p112
    %p119 = scmp.eq.s32.totalorder %s9, 1
    %p120 = por %p118, %p119
    %p121 = scmp.ne.s32.totalorder %s113, %s116
    %p122 = scmp.eq.s32.totalorder %s9, 0
    %p123 = por %p121, %p122
    %p124 = scmp.ne.s32.totalorder %s113, %s116
    %p125 = scmp.eq.s32.totalorder %s14, 1
    %p126 = por %p124, %p125
    %p127 = scmp.ne.s32.totalorder %s116, %s117
    %p128 = scmp.eq.s32.totalorder %s14, 0
    %p129 = por %p127, %p128
    %p130 = scmp.ne.s32.totalorder %s116, %s117
    %p131 = scmp.eq.s32.totalorder %s15, 1
    %p132 = por %p130, %p131
    %p134 = scmp.ne.s32.totalorder %s117, %s133
    %p135 = scmp.eq.s32.totalorder %s15, 0
    %p136 = por %p134, %p135
    %p137 = scmp.le.s32.totalorder 1, %s9
    %p138 = scmp.lt.s32.totalorder %s9, 3
    %p139 = pnand %p137, %p138
    %p140 = pneg %p139
    // Predicated region
    $region9: #{fwd.4} parent=5 // pred_check
      _
    $region10: #{fwd.4} parent=5 // pred_check_branch
      %142 = sbr.rel (%p139) target = $region12
    $region11: #{fwd.4} parent=5 // pred_region
      %s143 = ssub.s32 %s9, 1
    $region12: #{fwd.4} parent=5 // pred_fallthru
      _
    %p144 = scmp.lt.s32.totalorder %s9, 2
    // Predicated region
    $region13: #{fwd.4} parent=5 // pred_check
      %p145 = pneg %p144
    $region14: #{fwd.4} parent=5 // pred_check_branch
      %147 = sbr.rel (%p145) target = $region16
    $region15: #{fwd.4} parent=5 // pred_region
      // Predicated region
      $region17: #{fwd.4} parent=15 // pred_check
        %p148 = pneg %p43
      $region18: #{fwd.4} parent=15 // pred_check_branch
        %150 = sbr.rel (%p148) target = $region20
      $region19: #{fwd.4} parent=15 // pred_region
        %s151 = smul.u32 16, %s17
        %p152 = scmp.lt.s32.totalorder %s16, 1
        %s153 = scalar_select %p152, %s16, 1
        %p154 = scmp.lt.s32.totalorder %s151, 15
        %s155 = scalar_select %p154, %s151, 15
        %s156 = smul.addr %s153, 16
        %s157 = sadd.s32 %s155, %s156
        %s158 = smul.addr %s157, 4
        %s159 = scalar_lea.vmem %s0, %s158
        %s160 = smul.u32 16, %s17
      $region20: #{fwd.4} parent=15 // pred_fallthru
        _
      // Predicated region
      $region21: #{fwd.4} parent=15 // pred_check
        %p161 = pneg %p69
      $region22: #{fwd.4} parent=15 // pred_check_branch
        %163 = sbr.rel (%p161) target = $region24
      $region23: #{fwd.4} parent=15 // pred_region
        %p164 = scmp.lt.s32.totalorder %s16, 1
        %s165 = scalar_select %p164, %s16, 1
        %s166 = smul.addr %s165, 4
        %s167 = smul.addr %s166, 4
        %s168 = scalar_lea.vmem %s1, %s167
      $region24: #{fwd.4} parent=15 // pred_fallthru
        _
      // Predicated region
      $region25: #{fwd.4} parent=15 // pred_check
        %p169 = pneg %p95
      $region26: #{fwd.4} parent=15 // pred_check_branch
        %171 = sbr.rel (%p169) target = $region28
      $region27: #{fwd.4} parent=15 // pred_region
        %p172 = scmp.lt.s32.totalorder %s16, 1
        %s173 = scalar_select %p172, %s16, 1
        %s174 = scalar_lea.vmem %s2, %s173
      $region28: #{fwd.4} parent=15 // pred_fallthru
        _
    $region16: #{fwd.4} parent=5 // pred_fallthru
      _
    %p175 = scmp.le.s32.totalorder 1, %s9
    %p176 = scmp.lt.s32.totalorder %s9, 3
    %p177 = pnand %p175, %p176
    %p178 = pneg %p177
    // Predicated region
    $region29: #{fwd.4} parent=5 // pred_check
      _
    $region30: #{fwd.4} parent=5 // pred_check_branch
      %180 = sbr.rel (%p177) target = $region32
    $region31: #{fwd.4} parent=5 // pred_region
      %s181 = ssub.s32 %s9, 1
      %s182 = smul.u32 16, %s19
      %p183 = scmp.lt.s32.totalorder %s18, 1
      %s184 = scalar_select %p183, %s18, 1
      %p185 = scmp.lt.s32.totalorder %s182, 15
      %s186 = scalar_select %p185, %s182, 15
      %s187 = smul.addr %s184, 16
      %s188 = sadd.s32 %s186, %s187
      %s189 = smul.addr %s188, 4
      %s190 = scalar_lea.vmem %s0, %s189
      %p191 = pneg %p49
      %p192 = pneg %p46
      %p193 = scmp.lt.s32.totalorder %s18, 1
      %s194 = scalar_select %p193, %s18, 1
      %s195 = smul.addr %s194, 4
      %s196 = smul.addr %s195, 4
      %s197 = scalar_lea.vmem %s1, %s196
      %p198 = pneg %p75
      %p199 = pneg %p72
      %p200 = scmp.lt.s32.totalorder %s18, 1
      %s201 = scalar_select %p200, %s18, 1
      %s202 = scalar_lea.vmem %s2, %s201
      %p203 = pneg %p101
      %p204 = pneg %p98
      %p205 = pneg %p129
      %p206 = pneg %p126
      %s207 = smul.u32 16, %s19
      %p208 = scmp.lt.s32.totalorder %s18, 1
      %s209 = scalar_select %p208, %s18, 1
      %p210 = scmp.lt.s32.totalorder %s207, 15
      %s211 = scalar_select %p210, %s207, 15
      %s212 = smul.addr %s209, 16
      %s213 = sadd.s32 %s211, %s212
      %s214 = smul.addr %s213, 4
      %s215 = scalar_lea.vmem %s3, %s214
      %s216 = smul.u32 16, %s19
      %p217 = scmp.lt.s32.totalorder %s18, 1
      %s218 = scalar_select %p217, %s18, 1
      %p219 = scmp.lt.s32.totalorder %s216, 15
      %s220 = scalar_select %p219, %s216, 15
      %s221 = smul.addr %s218, 16
      %s222 = sadd.s32 %s220, %s221
      %s223 = smul.addr %s222, 4
      %s224 = scalar_lea.vmem %s0, %s223
      %s225 = smul.u32 16, %s19
      %p226 = scmp.lt.s32.totalorder %s18, 1
      %s227 = scalar_select %p226, %s18, 1
      %s228 = smul.addr %s227, 4
      %s229 = smul.addr %s228, 4
      %s230 = scalar_lea.vmem %s1, %s229
      %p231 = scmp.lt.s32.totalorder %s18, 1
      %s232 = scalar_select %p231, %s18, 1
      %s233 = scalar_lea.vmem %s2, %s232
      %s234 = smul.u32 16, %s19
      %p235 = scmp.lt.s32.totalorder %s18, 1
      %s236 = scalar_select %p235, %s18, 1
      %p237 = scmp.lt.s32.totalorder %s234, 15
      %s238 = scalar_select %p237, %s234, 15
      %s239 = smul.addr %s236, 16
      %s240 = sadd.s32 %s238, %s239
      %s241 = smul.addr %s240, 4
      %s242 = scalar_lea.vmem %s3, %s241
      %s243 = smul.u32 16, %s19
      %v245 = vld [vmem:[%s224] sm:$0xf]
      %v246 = vld [vmem:[%s224 + $0x4] sm:$0xf]
      %v247 = vld [vmem:[%s224 + $0x8] sm:$0xf]
      %v248 = vld [vmem:[%s224 + $0xc] sm:$0xf]
      %v249 = vld [vmem:[%s224 + $0x10] sm:$0xf]
      %v250 = vld [vmem:[%s224 + $0x14] sm:$0xf]
      %v251 = vld [vmem:[%s224 + $0x18] sm:$0xf]
      %v252 = vld [vmem:[%s224 + $0x1c] sm:$0xf]
      %v253 = vld [vmem:[%s224 + $0x20] sm:$0xf]
      %v254 = vld [vmem:[%s224 + $0x24] sm:$0xf]
      %v255 = vld [vmem:[%s224 + $0x28] sm:$0xf]
      %v256 = vld [vmem:[%s224 + $0x2c] sm:$0xf]
      %v257 = vld [vmem:[%s224 + $0x30] sm:$0xf]
      %v258 = vld [vmem:[%s224 + $0x34] sm:$0xf]
      %v259 = vld [vmem:[%s224 + $0x38] sm:$0xf]
      %v260 = vld [vmem:[%s224 + $0x3c] sm:$0xf]
      %v261 = vld [vmem:[%s230] sm:$0xf]
      %v262 = vld [vmem:[%s230 + $0x4] sm:$0xf]
      %v263 = vld [vmem:[%s230 + $0x8] sm:$0xf]
      %v264 = vld [vmem:[%s230 + $0xc] sm:$0x3]
      %v265 = vld [vmem:[%s233] sm:$0x1]
      %v267 = vperm.slane %v265, 0
      %v285 = vunpack.c.l.b16 %v245
      %v286 = vunpack.c.l.b16 %v246
      %v287 = vunpack.c.l.b16 %v247
      %v288 = vunpack.c.l.b16 %v248
      %v289 = vunpack.c.l.b16 %v249
      %v290 = vunpack.c.l.b16 %v250
      %v291 = vunpack.c.l.b16 %v251
      %v292 = vunpack.c.l.b16 %v252
      %v293 = vunpack.c.l.b16 %v253
      %v294 = vunpack.c.l.b16 %v254
      %v295 = vunpack.c.l.b16 %v255
      %v296 = vunpack.c.l.b16 %v256
      %v297 = vunpack.c.l.b16 %v257
      %v298 = vunpack.c.l.b16 %v258
      %v299 = vunpack.c.l.b16 %v259
      %v300 = vunpack.c.l.b16 %v260
      %v301 = vpack.c.b16 %v286, %v285
      %v302 = vpack.c.b16 %v288, %v287
      %v303 = vpack.c.b16 %v290, %v289
      %v304 = vpack.c.b16 %v292, %v291
      %v305 = vpack.c.b16 %v294, %v293
      %v306 = vpack.c.b16 %v296, %v295
      %v307 = vpack.c.b16 %v298, %v297
      %v308 = vpack.c.b16 %v300, %v299
      %v313 = vunpack.c.l.b16 %v261
      %v314 = vunpack.c.l.b16 %v262
      %v315 = vunpack.c.l.b16 %v263
      %v316 = vunpack.c.l.b16 %v264
      %v317 = vpack.c.b16 %v314, %v313
      %v318 = vpack.c.b16 %v316, %v315
      %vm320 = vcmask 220160
      %v322 = vsel %vm320, %v301, 0
      %v325 = vsel %vm320, %v302, 0
      %v328 = vsel %vm320, %v303, 0
      %v331 = vsel %vm320, %v304, 0
      %v334 = vsel %vm320, %v305, 0
      %v337 = vsel %vm320, %v306, 0
      %v340 = vsel %vm320, %v307, 0
      %v343 = vsel %vm320, %v308, 0
      %vm345 = vcmask 1044480
      %vm346 = vcmask 1045504
      %v347 = vsel %vm345, 4294967295, 65535
      %v348 = vsel %vm346, %v347, 0
      %v350 = vand.u32 %v318, %v348
      %352 = vmatpush.bf16.msra.mxu0 0
      %353 = vmatpush.bf16.msra.mxu0 0
      %354 = vmatpush.bf16.msra.mxu0 0
      %355 = vmatpush.bf16.msra.mxu0 0
      %356 = vmatpush.bf16.msra.mxu0 0
      %357 = vmatpush.bf16.msra.mxu0 0
      %358 = vmatpush.bf16.msra.mxu0 %v350
      %359 = vmatpush.bf16.msra.mxu0 %v317
      %360 = vmatmul.bf16.gmra.mxu0 %v322
      %v361 = vpop.f32.mrf.mxu0
      %v362 = vadd.f32 %v267, %v361
      %v363 = vpop.f32.mrf.mxu0
      %v364 = vadd.f32 %v267, %v363
      %365 = vmatmul.bf16.gmra.mxu0 %v325
      %v366 = vpop.f32.mrf.mxu0
      %v367 = vadd.f32 %v267, %v366
      %v368 = vpop.f32.mrf.mxu0
      %v369 = vadd.f32 %v267, %v368
      %370 = vmatmul.bf16.gmra.mxu0 %v328
      %v371 = vpop.f32.mrf.mxu0
      %v372 = vadd.f32 %v267, %v371
      %v373 = vpop.f32.mrf.mxu0
      %v374 = vadd.f32 %v267, %v373
      %375 = vmatmul.bf16.gmra.mxu0 %v331
      %v376 = vpop.f32.mrf.mxu0
      %v377 = vadd.f32 %v267, %v376
      %v378 = vpop.f32.mrf.mxu0
      %v379 = vadd.f32 %v267, %v378
      %380 = vmatmul.bf16.gmra.mxu0 %v334
      %v381 = vpop.f32.mrf.mxu0
      %v382 = vadd.f32 %v267, %v381
      %v383 = vpop.f32.mrf.mxu0
      %v384 = vadd.f32 %v267, %v383
      %385 = vmatmul.bf16.gmra.mxu0 %v337
      %v386 = vpop.f32.mrf.mxu0
      %v387 = vadd.f32 %v267, %v386
      %v388 = vpop.f32.mrf.mxu0
      %v389 = vadd.f32 %v267, %v388
      %390 = vmatmul.bf16.gmra.mxu0 %v340
      %v391 = vpop.f32.mrf.mxu0
      %v392 = vadd.f32 %v267, %v391
      %v393 = vpop.f32.mrf.mxu0
      %v394 = vadd.f32 %v267, %v393
      %395 = vmatmul.bf16.gmra.mxu0 %v343
      %v396 = vpop.f32.mrf.mxu0
      %v397 = vadd.f32 %v267, %v396
      %v398 = vpop.f32.mrf.mxu0
      %v399 = vadd.f32 %v267, %v398
      %400 = vdwg.mxu0
      %v401 = vpack.c.bf16 %v362, %v362
      %v402 = vpack.c.bf16 %v364, %v364
      %v403 = vpack.c.bf16 %v367, %v367
      %v404 = vpack.c.bf16 %v369, %v369
      %v405 = vpack.c.bf16 %v372, %v372
      %v406 = vpack.c.bf16 %v374, %v374
      %v407 = vpack.c.bf16 %v377, %v377
      %v408 = vpack.c.bf16 %v379, %v379
      %v409 = vpack.c.bf16 %v382, %v382
      %v410 = vpack.c.bf16 %v384, %v384
      %v411 = vpack.c.bf16 %v387, %v387
      %v412 = vpack.c.bf16 %v389, %v389
      %v413 = vpack.c.bf16 %v392, %v392
      %v414 = vpack.c.bf16 %v394, %v394
      %v415 = vpack.c.bf16 %v397, %v397
      %v416 = vpack.c.bf16 %v399, %v399
      %vm417 = vcmask 60416
      %418 = vst.msk [vmem:[%s242] sm:$0xf] %vm417, %v401
      %419 = vst.msk [vmem:[%s242 + $0x4] sm:$0xf] %vm417, %v402
      %420 = vst.msk [vmem:[%s242 + $0x8] sm:$0xf] %vm417, %v403
      %421 = vst.msk [vmem:[%s242 + $0xc] sm:$0xf] %vm417, %v404
      %422 = vst.msk [vmem:[%s242 + $0x10] sm:$0xf] %vm417, %v405
      %423 = vst.msk [vmem:[%s242 + $0x14] sm:$0xf] %vm417, %v406
      %424 = vst.msk [vmem:[%s242 + $0x18] sm:$0xf] %vm417, %v407
      %425 = vst.msk [vmem:[%s242 + $0x1c] sm:$0xf] %vm417, %v408
      %426 = vst.msk [vmem:[%s242 + $0x20] sm:$0xf] %vm417, %v409
      %427 = vst.msk [vmem:[%s242 + $0x24] sm:$0xf] %vm417, %v410
      %428 = vst.msk [vmem:[%s242 + $0x28] sm:$0xf] %vm417, %v411
      %429 = vst.msk [vmem:[%s242 + $0x2c] sm:$0xf] %vm417, %v412
      %430 = vst.msk [vmem:[%s242 + $0x30] sm:$0xf] %vm417, %v413
      %431 = vst.msk [vmem:[%s242 + $0x34] sm:$0xf] %vm417, %v414
      %432 = vst.msk [vmem:[%s242 + $0x38] sm:$0xf] %vm417, %v415
      %433 = vst.msk [vmem:[%s242 + $0x3c] sm:$0xf] %vm417, %v416
      %s434 = smul.u32 16, %s19
      %p435 = scmp.lt.s32.totalorder %s18, 1
      %s436 = scalar_select %p435, %s18, 1
      %p437 = scmp.lt.s32.totalorder %s434, 15
      %s438 = scalar_select %p437, %s434, 15
      %s439 = smul.addr %s436, 16
      %s440 = sadd.s32 %s438, %s439
      %s441 = smul.addr %s440, 4
      %s442 = scalar_lea.vmem %s3, %s441
      // Predicated region
      $region33: #{fwd.4} parent=31 // pred_check
        %p443 = pneg %p126
      $region34: #{fwd.4} parent=31 // pred_check_branch
        %445 = sbr.rel (%p443) target = $region36
      $region35: #{fwd.4} parent=31 // pred_region
        %s446 = smul.u32 16, %s19
      $region36: #{fwd.4} parent=31 // pred_fallthru
        _
    $region32: #{fwd.4} parent=5 // pred_fallthru
      _
    %p447 = scmp.le.s32.totalorder 2, %s9
    // Predicated region
    $region37: #{fwd.4} parent=5 // pred_check
      %p448 = pneg %p447
    $region38: #{fwd.4} parent=5 // pred_check_branch
      %450 = sbr.rel (%p448) target = $region40
    $region39: #{fwd.4} parent=5 // pred_region
      %s451 = ssub.s32 %s9, 2
      // Predicated region
      $region41: #{fwd.4} parent=39 // pred_check
        %p452 = pneg %p132
      $region42: #{fwd.4} parent=39 // pred_check_branch
        %454 = sbr.rel (%p452) target = $region44
      $region43: #{fwd.4} parent=39 // pred_region
        %s455 = smul.u32 16, %s21
        %p456 = scmp.lt.s32.totalorder %s20, 1
        %s457 = scalar_select %p456, %s20, 1
        %p458 = scmp.lt.s32.totalorder %s455, 15
        %s459 = scalar_select %p458, %s455, 15
        %s460 = smul.addr %s457, 16
        %s461 = sadd.s32 %s459, %s460
        %s462 = smul.addr %s461, 4
        %s463 = scalar_lea.vmem %s3, %s462
      $region44: #{fwd.4} parent=39 // pred_fallthru
        _
    $region40: #{fwd.4} parent=5 // pred_fallthru
      _
  $region6: #{fwd.4} parent=0 // loop_footer
    %s13 = sadd.s32 1, %s9
  $region7: #{fwd.4} parent=0 // loop_footer_branch
    %8 = sbr.rel target = $region3
  $region8: #{fwd.4} parent=0 // loop_exit
    _

// kernel: fwd.7
$region0: #{fwd.7}
  #allocation0 [shape = 'u32[]', space=smem, size = 0x4, offset = 0x4, fixed_abs, tag = 'smem constant byte address 0x4 - core index']
  #allocation1 [shape = 'u32[72,128]{1,0:T(1,128)}', space=vmem, size = 0x9000, scoped, tag = 'internal scratch']
  %s0 = inlined_call_operand.vmem [shape: bf16[2,72,8], index: 0, kind: input, shape index: {}]
  %s1 = inlined_call_operand.vmem [shape: bf16[2,8,8], index: 1, kind: input, shape index: {}]
  %s2 = inlined_call_operand.vmem [shape: f32[2,1,8], index: 2, kind: input, shape index: {}]
  %s3 = inlined_call_operand.vmem [shape: f32[2,72,8], index: 3, kind: output, shape index: {}]
  %s4 = sld [smem:[#allocation0]]
  $region93: #{fwd.7} parent=0
    _
  %s6 = ssub.s32 1, %s4
  %s7 = scalar_select 0, %s6, %s4
  $region1: #{fwd.7} parent=0
    #allocation2 [shape = 'u8[65536]{0}', space=vmem, size = 0x10000, scoped, tag = 'output window, operand 0']
    loop: start=0, step=1, limit=6
    $region2: #{fwd.7} parent=1 // loop_pre_header
      _
    $region3: #{fwd.7} parent=1 // loop_header
      %s9 = sphi 0, %s13
      %p10 = scmp.ge.s32.totalorder %s9, 6
      %s16 = sphi 0, %s28
      %s17 = sphi 0, %s24
      %s18 = sphi 0, %s16
      %s19 = sphi 0, %s17
      %s20 = sphi 0, %s18
      %s21 = sphi 0, %s19
      %s33 = sphi 0, %s35
      %s36 = sphi 0, %s33
      %s37 = sphi 0, %s36
      %s53 = sphi 0, %s37
      %s59 = sphi 0, %s61
      %s62 = sphi 0, %s59
      %s63 = sphi 0, %s62
      %s79 = sphi 0, %s63
      %s85 = sphi 0, %s87
      %s88 = sphi 0, %s85
      %s89 = sphi 0, %s88
      %s105 = sphi 0, %s89
      %s113 = sphi 0, %s115
      %s116 = sphi 0, %s113
      %s117 = sphi 0, %s116
      %s133 = sphi 0, %s117
    $region4: #{fwd.7} parent=1 // loop_header_branch
      %12 = sbr.rel (%p10) target = $region8
    $region5: #{fwd.7} parent=1 // loop_body
      %s14 = ssub.s32 %s9, 1
      %s15 = ssub.s32 %s9, 2
      %s22 = sadd.s32 1, %s17
      %p23 = scmp.ge.s32.totalorder %s22, 2
      %s24 = scalar_select %p23, 0, %s22
      %s25 = sadd.s32 1, %s16
      %s26 = scalar_select %p23, %s25, %s16
      %p27 = scmp.ge.s32.totalorder %s26, 2
      %s28 = scalar_select %p27, 0, %s26
      %s29 = ssub.s32 %s16, %s28
      %s30 = ssub.s32 %s17, %s24
      %s31 = sor.u32 %s29, %s30
      %p32 = scmp.eq.s32.totalorder %s31, 0
      %s34 = sadd.s32 %s33, 1
      %s35 = scalar_select %p32, %s33, %s34
      %p38 = pneg %p32
      %p39 = scmp.eq.s32.totalorder %s9, 3
      %p40 = por %p38, %p39
      %p41 = scmp.ne.s32.totalorder %s33, %s36
      %p42 = scmp.eq.s32.totalorder %s9, 0
      %p43 = por %p41, %p42
      %p44 = scmp.ne.s32.totalorder %s33, %s36
      %p45 = scmp.eq.s32.totalorder %s14, 3
      %p46 = por %p44, %p45
      %p47 = scmp.ne.s32.totalorder %s36, %s37
      %p48 = scmp.eq.s32.totalorder %s14, 0
      %p49 = por %p47, %p48
      %p50 = scmp.ne.s32.totalorder %s36, %s37
      %p51 = scmp.eq.s32.totalorder %s15, 3
      %p52 = por %p50, %p51
      %p54 = scmp.ne.s32.totalorder %s37, %s53
      %p55 = scmp.eq.s32.totalorder %s15, 0
      %p56 = por %p54, %p55
      %s57 = ssub.s32 %s16, %s28
      %p58 = scmp.eq.s32.totalorder %s57, 0
      %s60 = sadd.s32 %s59, 1
      %s61 = scalar_select %p58, %s59, %s60
      %p64 = pneg %p58
      %p65 = scmp.eq.s32.totalorder %s9, 3
      %p66 = por %p64, %p65
      %p67 = scmp.ne.s32.totalorder %s59, %s62
      %p68 = scmp.eq.s32.totalorder %s9, 0
      %p69 = por %p67, %p68
      %p70 = scmp.ne.s32.totalorder %s59, %s62
      %p71 = scmp.eq.s32.totalorder %s14, 3
      %p72 = por %p70, %p71
      %p73 = scmp.ne.s32.totalorder %s62, %s63
      %p74 = scmp.eq.s32.totalorder %s14, 0
      %p75 = por %p73, %p74
      %p76 = scmp.ne.s32.totalorder %s62, %s63
      %p77 = scmp.eq.s32.totalorder %s15, 3
      %p78 = por %p76, %p77
      %p80 = scmp.ne.s32.totalorder %s63, %s79
      %p81 = scmp.eq.s32.totalorder %s15, 0
      %p82 = por %p80, %p81
      %s83 = ssub.s32 %s16, %s28
      %p84 = scmp.eq.s32.totalorder %s83, 0
      %s86 = sadd.s32 %s85, 1
      %s87 = scalar_select %p84, %s85, %s86
      %p90 = pneg %p84
      %p91 = scmp.eq.s32.totalorder %s9, 3
      %p92 = por %p90, %p91
      %p93 = scmp.ne.s32.totalorder %s85, %s88
      %p94 = scmp.eq.s32.totalorder %s9, 0
      %p95 = por %p93, %p94
      %p96 = scmp.ne.s32.totalorder %s85, %s88
      %p97 = scmp.eq.s32.totalorder %s14, 3
      %p98 = por %p96, %p97
      %p99 = scmp.ne.s32.totalorder %s88, %s89
      %p100 = scmp.eq.s32.totalorder %s14, 0
      %p101 = por %p99, %p100
      %p102 = scmp.ne.s32.totalorder %s88, %s89
      %p103 = scmp.eq.s32.totalorder %s15, 3
      %p104 = por %p102, %p103
      %p106 = scmp.ne.s32.totalorder %s89, %s105
      %p107 = scmp.eq.s32.totalorder %s15, 0
      %p108 = por %p106, %p107
      %s109 = ssub.s32 %s16, %s28
      %s110 = ssub.s32 %s17, %s24
      %s111 = sor.u32 %s109, %s110
      %p112 = scmp.eq.s32.totalorder %s111, 0
      %s114 = sadd.s32 %s113, 1
      %s115 = scalar_select %p112, %s113, %s114
      %p118 = pneg %p112
      %p119 = scmp.eq.s32.totalorder %s9, 3
      %p120 = por %p118, %p119
      %p121 = scmp.ne.s32.totalorder %s113, %s116
      %p122 = scmp.eq.s32.totalorder %s9, 0
      %p123 = por %p121, %p122
      %p124 = scmp.ne.s32.totalorder %s113, %s116
      %p125 = scmp.eq.s32.totalorder %s14, 3
      %p126 = por %p124, %p125
      %p127 = scmp.ne.s32.totalorder %s116, %s117
      %p128 = scmp.eq.s32.totalorder %s14, 0
      %p129 = por %p127, %p128
      %p130 = scmp.ne.s32.totalorder %s116, %s117
      %p131 = scmp.eq.s32.totalorder %s15, 3
      %p132 = por %p130, %p131
      %p134 = scmp.ne.s32.totalorder %s117, %s133
      %p135 = scmp.eq.s32.totalorder %s15, 0
      %p136 = por %p134, %p135
      %p137 = scmp.le.s32.totalorder 1, %s9
      %p138 = scmp.lt.s32.totalorder %s9, 5
      %p139 = pnand %p137, %p138
      %p140 = pneg %p139
      // Predicated region
      $region9: #{fwd.7} parent=5 // pred_check
        _
      $region10: #{fwd.7} parent=5 // pred_check_branch
        %142 = sbr.rel (%p139) target = $region12
      $region11: #{fwd.7} parent=5 // pred_region
        %s143 = ssub.s32 %s9, 1
      $region12: #{fwd.7} parent=5 // pred_fallthru
        _
      %p144 = scmp.lt.s32.totalorder %s9, 4
      // Predicated region
      $region13: #{fwd.7} parent=5 // pred_check
        %p145 = pneg %p144
      $region14: #{fwd.7} parent=5 // pred_check_branch
        %147 = sbr.rel (%p145) target = $region16
      $region15: #{fwd.7} parent=5 // pred_region
        // Predicated region
        $region17: #{fwd.7} parent=15 // pred_check
          %p148 = pneg %p43
        $region18: #{fwd.7} parent=15 // pred_check_branch
          %150 = sbr.rel (%p148) target = $region20
        $region19: #{fwd.7} parent=15 // pred_region
          %s151 = smul.u32 8, %s17
          %s152 = ssub.s32 9, %s151
          %p153 = scmp.lt.s32.totalorder %s152, 8
          %s154 = scalar_select %p153, %s152, 8
          %s155 = smul.u32 4, %s154
          %p156 = scmp.lt.s32.totalorder %s16, 1
          %s157 = scalar_select %p156, %s16, 1
          %p158 = scmp.lt.s32.totalorder %s151, 8
          %s159 = scalar_select %p158, %s151, 8
          %s160 = smul.addr %s157, 9
          %s161 = sadd.s32 %s159, %s160
          %s162 = smul.addr %s161, 4
          %s163 = scalar_lea.vmem %s0, %s162
          %s164 = smul.u32 8, %s17
          %s165 = ssub.s32 9, %s164
          %p166 = scmp.lt.s32.totalorder %s165, 8
          %s167 = scalar_select %p166, %s165, 8
          %s168 = smul.u32 4, %s167
        $region20: #{fwd.7} parent=15 // pred_fallthru
          _
        // Predicated region
        $region21: #{fwd.7} parent=15 // pred_check
          %p169 = pneg %p69
        $region22: #{fwd.7} parent=15 // pred_check_branch
          %171 = sbr.rel (%p169) target = $region24
        $region23: #{fwd.7} parent=15 // pred_region
          %p172 = scmp.lt.s32.totalorder %s16, 1
          %s173 = scalar_select %p172, %s16, 1
          %s174 = smul.addr %s173, 4
          %s175 = scalar_lea.vmem %s1, %s174
        $region24: #{fwd.7} parent=15 // pred_fallthru
          _
        // Predicated region
        $region25: #{fwd.7} parent=15 // pred_check
          %p176 = pneg %p95
        $region26: #{fwd.7} parent=15 // pred_check_branch
          %178 = sbr.rel (%p176) target = $region28
        $region27: #{fwd.7} parent=15 // pred_region
          %p179 = scmp.lt.s32.totalorder %s16, 1
          %s180 = scalar_select %p179, %s16, 1
          %s181 = scalar_lea.vmem %s2, %s180
        $region28: #{fwd.7} parent=15 // pred_fallthru
          _
      $region16: #{fwd.7} parent=5 // pred_fallthru
        _
      %p182 = scmp.le.s32.totalorder 1, %s9
      %p183 = scmp.lt.s32.totalorder %s9, 5
      %p184 = pnand %p182, %p183
      %p185 = pneg %p184
      // Predicated region
      $region29: #{fwd.7} parent=5 // pred_check
        _
      $region30: #{fwd.7} parent=5 // pred_check_branch
        %187 = sbr.rel (%p184) target = $region32
      $region31: #{fwd.7} parent=5 // pred_region
        %s188 = ssub.s32 %s9, 1
        %s189 = smul.u32 8, %s19
        %s190 = ssub.s32 9, %s189
        %p191 = scmp.lt.s32.totalorder %s190, 8
        %s192 = scalar_select %p191, %s190, 8
        %s193 = smul.u32 4, %s192
        %p194 = scmp.lt.s32.totalorder %s18, 1
        %s195 = scalar_select %p194, %s18, 1
        %p196 = scmp.lt.s32.totalorder %s189, 8
        %s197 = scalar_select %p196, %s189, 8
        %s198 = smul.addr %s195, 9
        %s199 = sadd.s32 %s197, %s198
        %s200 = smul.addr %s199, 4
        %s201 = scalar_lea.vmem %s0, %s200
        %p202 = pneg %p49
        %p203 = pneg %p46
        %p204 = scmp.lt.s32.totalorder %s18, 1
        %s205 = scalar_select %p204, %s18, 1
        %s206 = smul.addr %s205, 4
        %s207 = scalar_lea.vmem %s1, %s206
        %p208 = pneg %p75
        %p209 = pneg %p72
        %p210 = scmp.lt.s32.totalorder %s18, 1
        %s211 = scalar_select %p210, %s18, 1
        %s212 = scalar_lea.vmem %s2, %s211
        %p213 = pneg %p101
        %p214 = pneg %p98
        %p215 = pneg %p129
        %p216 = pneg %p126
        %s217 = sand.u32 %s116, 1
        %s218 = sand.u32 %s116, 1
        %s219 = smul.addr %s218, 64
        %s220 = scalar_lea.vmem [#allocation2], %s219
        %s221 = smul.u32 8, %s19
        %s222 = ssub.s32 9, %s221
        %p223 = scmp.lt.s32.totalorder %s222, 8
        %s224 = scalar_select %p223, %s222, 8
        %s225 = smul.u32 4, %s224
        %p226 = scmp.lt.s32.totalorder %s18, 1
        %s227 = scalar_select %p226, %s18, 1
        %p228 = scmp.lt.s32.totalorder %s221, 8
        %s229 = scalar_select %p228, %s221, 8
        %s230 = smul.addr %s227, 9
        %s231 = sadd.s32 %s229, %s230
        %s232 = smul.addr %s231, 4
        %s233 = scalar_lea.vmem %s0, %s232
        %s234 = smul.u32 8, %s19
        %s235 = ssub.s32 9, %s234
        %p236 = scmp.lt.s32.totalorder %s235, 8
        %s237 = scalar_select %p236, %s235, 8
        %s238 = smul.u32 4, %s237
        %p239 = scmp.lt.s32.totalorder %s18, 1
        %s240 = scalar_select %p239, %s18, 1
        %s241 = smul.addr %s240, 4
        %s242 = scalar_lea.vmem %s1, %s241
        %p243 = scmp.lt.s32.totalorder %s18, 1
        %s244 = scalar_select %p243, %s18, 1
        %s245 = scalar_lea.vmem %s2, %s244
        %s246 = smul.u32 8, %s19
        %s247 = ssub.s32 9, %s246
        %p248 = scmp.lt.s32.totalorder %s247, 8
        %s249 = scalar_select %p248, %s247, 8
        %s250 = smul.u32 8, %s249
        %v252 = vld [vmem:[%s233] sm:$0xf]
        %v253 = vld [vmem:[%s233 + $0x4] sm:$0xf]
        %v254 = vld [vmem:[%s233 + $0x8] sm:$0xf]
        %v255 = vld [vmem:[%s233 + $0xc] sm:$0xf]
        %v256 = vld [vmem:[%s233 + $0x10] sm:$0xf]
        %v257 = vld [vmem:[%s233 + $0x14] sm:$0xf]
        %v258 = vld [vmem:[%s233 + $0x18] sm:$0xf]
        %v259 = vld [vmem:[%s233 + $0x1c] sm:$0xf]
        %v260 = vld [vmem:[%s242] sm:$0xf]
        %v261 = vld [vmem:[%s245] sm:$0x1]
        %v263 = vperm.slane %v261, 0
        %v273 = vunpack.c.l.b16 %v252
        %v274 = vunpack.c.l.b16 %v253
        %v275 = vunpack.c.l.b16 %v254
        %v276 = vunpack.c.l.b16 %v255
        %v277 = vunpack.c.l.b16 %v256
        %v278 = vunpack.c.l.b16 %v257
        %v279 = vunpack.c.l.b16 %v258
        %v280 = vunpack.c.l.b16 %v259
        %v281 = vpack.c.b16 %v274, %v273
        %v282 = vpack.c.b16 %v276, %v275
        %v283 = vpack.c.b16 %v278, %v277
        %v284 = vpack.c.b16 %v280, %v279
        %vm285 = vcmask 64512
        %v287 = vsel %vm285, %v281, 0
        %v290 = vsel %vm285, %v282, 0
        %v293 = vsel %vm285, %v283, 0
        %v296 = vsel %vm285, %v284, 0
        %vm298 = vcmask 1043456
        %v300 = vsel %vm298, %v260, 0
        %302 = vmatpush.bf16.msra.mxu0 0
        %303 = vmatpush.bf16.msra.mxu0 0
        %304 = vmatpush.bf16.msra.mxu0 0
        %305 = vmatpush.bf16.msra.mxu0 0
        %306 = vmatpush.bf16.msra.mxu0 0
        %307 = vmatpush.bf16.msra.mxu0 0
        %308 = vmatpush.bf16.msra.mxu0 0
        %309 = vmatpush.bf16.msra.mxu0 %v300
        %310 = vmatmul.bf16.gmra.mxu0 %v287
        %v311 = vpop.f32.mrf.mxu0
        %v312 = vadd.f32 %v263, %v311
        %v313 = vpop.f32.mrf.mxu0
        %v314 = vadd.f32 %v263, %v313
        %315 = vmatmul.bf16.gmra.mxu0 %v290
        %v316 = vpop.f32.mrf.mxu0
        %v317 = vadd.f32 %v263, %v316
        %v318 = vpop.f32.mrf.mxu0
        %v319 = vadd.f32 %v263, %v318
        %320 = vmatmul.bf16.gmra.mxu0 %v293
        %v321 = vpop.f32.mrf.mxu0
        %v322 = vadd.f32 %v263, %v321
        %v323 = vpop.f32.mrf.mxu0
        %v324 = vadd.f32 %v263, %v323
        %325 = vmatmul.bf16.gmra.mxu0 %v296
        %v326 = vpop.f32.mrf.mxu0
        %v327 = vadd.f32 %v263, %v326
        %v328 = vpop.f32.mrf.mxu0
        %v329 = vadd.f32 %v263, %v328
        %330 = vdwg.mxu0
        %v331 = vxor.u32 %v312, 2147483648
        %v332 = vxor.u32 %v314, 2147483648
        %v333 = vxor.u32 %v317, 2147483648
        %v334 = vxor.u32 %v319, 2147483648
        %v335 = vxor.u32 %v322, 2147483648
        %v336 = vxor.u32 %v324, 2147483648
        %v337 = vxor.u32 %v327, 2147483648
        %v338 = vxor.u32 %v329, 2147483648
        %v339 = vmul.f32 %v331, 1.442695
        %v340 = vpow.pop %v339
        %v341 = vmul.f32 %v332, 1.442695
        %v342 = vpow.pop %v341
        %v343 = vmul.f32 %v333, 1.442695
        %v344 = vpow.pop %v343
        %v345 = vmul.f32 %v334, 1.442695
        %v346 = vpow.pop %v345
        %v347 = vmul.f32 %v335, 1.442695
        %v348 = vpow.pop %v347
        %v349 = vmul.f32 %v336, 1.442695
        %v350 = vpow.pop %v349
        %v351 = vmul.f32 %v337, 1.442695
        %v352 = vpow.pop %v351
        %v353 = vmul.f32 %v338, 1.442695
        %v354 = vpow.pop %v353
        %v355 = vadd.f32 %v340, 1.0
        %v356 = vadd.f32 %v342, 1.0
        %v357 = vadd.f32 %v344, 1.0
        %v358 = vadd.f32 %v346, 1.0
        %v359 = vadd.f32 %v348, 1.0
        %v360 = vadd.f32 %v350, 1.0
        %v361 = vadd.f32 %v352, 1.0
        %v362 = vadd.f32 %v354, 1.0
        %v363 = vrcp.pop %v355
        %v364 = vmul.f32 %v355, %v363
        %v365 = vsub.f32 1.0, %v364
        %v366 = vmul.f32 %v363, %v365
        %v367 = vadd.f32 %v363, %v366
        %vm368 = vweird.f32 %v355
        %vm369 = vweird.f32 %v363
        %vm370 = vmor %vm368, %vm369
        %v371 = vsel %vm370, %v363, %v367
        %v372 = vand.u32 2147483647, %v355
        %vm373 = vcmp.eq.f32.partialorder %v372, 8.507059e+37
        %v374 = vand.u32 %v355, 2147483648
        %v375 = vor.u32 1.1754944e-38, %v374
        %v376 = vsel %vm373, %v375, %v371
        %v377 = vmul.f32 1.0, %v376
        %v378 = vrcp.pop %v356
        %v379 = vmul.f32 %v356, %v378
        %v380 = vsub.f32 1.0, %v379
        %v381 = vmul.f32 %v378, %v380
        %v382 = vadd.f32 %v378, %v381
        %vm383 = vweird.f32 %v356
        %vm384 = vweird.f32 %v378
        %vm385 = vmor %vm383, %vm384
        %v386 = vsel %vm385, %v378, %v382
        %v387 = vand.u32 2147483647, %v356
        %vm388 = vcmp.eq.f32.partialorder %v387, 8.507059e+37
        %v389 = vand.u32 %v356, 2147483648
        %v390 = vor.u32 1.1754944e-38, %v389
        %v391 = vsel %vm388, %v390, %v386
        %v392 = vmul.f32 1.0, %v391
        %v393 = vrcp.pop %v357
        %v394 = vmul.f32 %v357, %v393
        %v395 = vsub.f32 1.0, %v394
        %v396 = vmul.f32 %v393, %v395
        %v397 = vadd.f32 %v393, %v396
        %vm398 = vweird.f32 %v357
        %vm399 = vweird.f32 %v393
        %vm400 = vmor %vm398, %vm399
        %v401 = vsel %vm400, %v393, %v397
        %v402 = vand.u32 2147483647, %v357
        %vm403 = vcmp.eq.f32.partialorder %v402, 8.507059e+37
        %v404 = vand.u32 %v357, 2147483648
        %v405 = vor.u32 1.1754944e-38, %v404
        %v406 = vsel %vm403, %v405, %v401
        %v407 = vmul.f32 1.0, %v406
        %v408 = vrcp.pop %v358
        %v409 = vmul.f32 %v358, %v408
        %v410 = vsub.f32 1.0, %v409
        %v411 = vmul.f32 %v408, %v410
        %v412 = vadd.f32 %v408, %v411
        %vm413 = vweird.f32 %v358
        %vm414 = vweird.f32 %v408
        %vm415 = vmor %vm413, %vm414
        %v416 = vsel %vm415, %v408, %v412
        %v417 = vand.u32 2147483647, %v358
        %vm418 = vcmp.eq.f32.partialorder %v417, 8.507059e+37
        %v419 = vand.u32 %v358, 2147483648
        %v420 = vor.u32 1.1754944e-38, %v419
        %v421 = vsel %vm418, %v420, %v416
        %v422 = vmul.f32 1.0, %v421
        %v423 = vrcp.pop %v359
        %v424 = vmul.f32 %v359, %v423
        %v425 = vsub.f32 1.0, %v424
        %v426 = vmul.f32 %v423, %v425
        %v427 = vadd.f32 %v423, %v426
        %vm428 = vweird.f32 %v359
        %vm429 = vweird.f32 %v423
        %vm430 = vmor %vm428, %vm429
        %v431 = vsel %vm430, %v423, %v427
        %v432 = vand.u32 2147483647, %v359
        %vm433 = vcmp.eq.f32.partialorder %v432, 8.507059e+37
        %v434 = vand.u32 %v359, 2147483648
        %v435 = vor.u32 1.1754944e-38, %v434
        %v436 = vsel %vm433, %v435, %v431
        %v437 = vmul.f32 1.0, %v436
        %v438 = vrcp.pop %v360
        %v439 = vmul.f32 %v360, %v438
        %v440 = vsub.f32 1.0, %v439
        %v441 = vmul.f32 %v438, %v440
        %v442 = vadd.f32 %v438, %v441
        %vm443 = vweird.f32 %v360
        %vm444 = vweird.f32 %v438
        %vm445 = vmor %vm443, %vm444
        %v446 = vsel %vm445, %v438, %v442
        %v447 = vand.u32 2147483647, %v360
        %vm448 = vcmp.eq.f32.partialorder %v447, 8.507059e+37
        %v449 = vand.u32 %v360, 2147483648
        %v450 = vor.u32 1.1754944e-38, %v449
        %v451 = vsel %vm448, %v450, %v446
        %v452 = vmul.f32 1.0, %v451
        %v453 = vrcp.pop %v361
        %v454 = vmul.f32 %v361, %v453
        %v455 = vsub.f32 1.0, %v454
        %v456 = vmul.f32 %v453, %v455
        %v457 = vadd.f32 %v453, %v456
        %vm458 = vweird.f32 %v361
        %vm459 = vweird.f32 %v453
        %vm460 = vmor %vm458, %vm459
        %v461 = vsel %vm460, %v453, %v457
        %v462 = vand.u32 2147483647, %v361
        %vm463 = vcmp.eq.f32.partialorder %v462, 8.507059e+37
        %v464 = vand.u32 %v361, 2147483648
        %v465 = vor.u32 1.1754944e-38, %v464
        %v466 = vsel %vm463, %v465, %v461
        %v467 = vmul.f32 1.0, %v466
        %v468 = vrcp.pop %v362
        %v469 = vmul.f32 %v362, %v468
        %v470 = vsub.f32 1.0, %v469
        %v471 = vmul.f32 %v468, %v470
        %v472 = vadd.f32 %v468, %v471
        %vm473 = vweird.f32 %v362
        %vm474 = vweird.f32 %v468
        %vm475 = vmor %vm473, %vm474
        %v476 = vsel %vm475, %v468, %v472
        %v477 = vand.u32 2147483647, %v362
        %vm478 = vcmp.eq.f32.partialorder %v477, 8.507059e+37
        %v479 = vand.u32 %v362, 2147483648
        %v480 = vor.u32 1.1754944e-38, %v479
        %v481 = vsel %vm478, %v480, %v476
        %v482 = vmul.f32 1.0, %v481
        %v483 = vmul.f32 %v312, %v377
        %v484 = vmul.f32 %v314, %v392
        %v485 = vmul.f32 %v317, %v407
        %v486 = vmul.f32 %v319, %v422
        %v487 = vmul.f32 %v322, %v437
        %v488 = vmul.f32 %v324, %v452
        %v489 = vmul.f32 %v327, %v467
        %v490 = vmul.f32 %v329, %v482
        %491 = vst.msk [vmem:[%s220] sm:$0xff] %vm285, %v483
        %492 = vst.msk [vmem:[%s220 + $0x8] sm:$0xff] %vm285, %v484
        %493 = vst.msk [vmem:[%s220 + $0x10] sm:$0xff] %vm285, %v485
        %494 = vst.msk [vmem:[%s220 + $0x18] sm:$0xff] %vm285, %v486
        %495 = vst.msk [vmem:[%s220 + $0x20] sm:$0xff] %vm285, %v487
        %496 = vst.msk [vmem:[%s220 + $0x28] sm:$0xff] %vm285, %v488
        %497 = vst.msk [vmem:[%s220 + $0x30] sm:$0xff] %vm285, %v489
        %498 = vst.msk [vmem:[%s220 + $0x38] sm:$0xff] %vm285, %v490
        %s499 = sand.u32 %s116, 1
        %s500 = sand.u32 %s116, 1
        %s501 = smul.addr %s500, 64
        %s502 = scalar_lea.vmem [#allocation2], %s501
        // Predicated region
        $region33: #{fwd.7} parent=31 // pred_check
          %p503 = pneg %p126
        $region34: #{fwd.7} parent=31 // pred_check_branch
          %505 = sbr.rel (%p503) target = $region36
        $region35: #{fwd.7} parent=31 // pred_region
          %s506 = smul.u32 8, %s19
          %s507 = ssub.s32 9, %s506
          %p508 = scmp.lt.s32.totalorder %s507, 8
          %s509 = scalar_select %p508, %s507, 8
          %s510 = smul.u32 8, %s509
          %p511 = scmp.ne.s32.totalorder 0, %s510
          %s512 = smul.addr %s18, 9
          %s513 = sadd.s32 %s506, %s512
          %s514 = smul.addr %s513, 8
          %s515 = scalar_lea.vmem %s3, %s514
          // Predicated region
          $region37: #{fwd.7} parent=35 // pred_check
            %p516 = pneg %p511
          $region38: #{fwd.7} parent=35 // pred_check_branch
            %518 = sbr.rel (%p516) target = $region40
          $region39: #{fwd.7} parent=35 // pred_region
            // Predicated region
            $region41: #{fwd.7} parent=39 // pred_check
              _
            $region42: #{fwd.7} parent=39 // pred_check_branch
              %520 = sbr.rel (0) target = $region44
            $region43: #{fwd.7} parent=39 // pred_region
              // Predicated region
              $region63: #{fwd.7} parent=43 // pred_check
                _
              $region64: #{fwd.7} parent=43 // pred_check_branch
                %584 = sbr.rel (0) target = $region66
              $region65: #{fwd.7} parent=43 // pred_region
                %s585 = sshrl.u32 %s509, 3
                // While loop
                $region67: #{fwd.7} parent=65 // loop_pre_header
                  _
                $region68: #{fwd.7} parent=65 // loop_header
                  %s587 = sphi 0, %s589
                  %p588 = scmp.ge.s32.totalorder %s587, %s585
                  %s592 = sphi 0, %s613
                  %s593 = sphi %s502, %s616
                  %s594 = sphi %s515, %s617
                $region69: #{fwd.7} parent=65 // loop_header_branch
                  %591 = sbr.rel (%p588) target = $region73
                $region70: #{fwd.7} parent=65 // loop_body
                  %v595 = vld [vmem:[%s593] sm:$0xff]
                  %596 = vst [vmem:[%s594] sm:$0xff] %v595
                  %v597 = vld [vmem:[%s593 + $0x8] sm:$0xff]
                  %598 = vst [vmem:[%s594 + $0x8] sm:$0xff] %v597
                  %v599 = vld [vmem:[%s593 + $0x10] sm:$0xff]
                  %600 = vst [vmem:[%s594 + $0x10] sm:$0xff] %v599
                  %v601 = vld [vmem:[%s593 + $0x18] sm:$0xff]
                  %602 = vst [vmem:[%s594 + $0x18] sm:$0xff] %v601
                  %v603 = vld [vmem:[%s593 + $0x20] sm:$0xff]
                  %604 = vst [vmem:[%s594 + $0x20] sm:$0xff] %v603
                  %v605 = vld [vmem:[%s593 + $0x28] sm:$0xff]
                  %606 = vst [vmem:[%s594 + $0x28] sm:$0xff] %v605
                  %v607 = vld [vmem:[%s593 + $0x30] sm:$0xff]
                  %608 = vst [vmem:[%s594 + $0x30] sm:$0xff] %v607
                  %v609 = vld [vmem:[%s593 + $0x38] sm:$0xff]
                  %610 = vst [vmem:[%s594 + $0x38] sm:$0xff] %v609
                  %s611 = sadd.s32 1, %s592
                  %p612 = scmp.ge.s32.totalorder %s611, %s585
                  %s613 = scalar_select %p612, 0, %s611
                  %s614 = smul.u32 %s613, 64
                  %s615 = smul.u32 %s613, 64
                  %s616 = scalar_lea.vmem %s502, %s614 [#allocation2]
                  %s617 = scalar_lea.vmem %s515, %s615
                $region71: #{fwd.7} parent=65 // loop_footer
                  %s589 = sadd.s32 %s587, 1
                $region72: #{fwd.7} parent=65 // loop_footer_branch
                  %586 = sbr.rel target = $region68
                $region73: #{fwd.7} parent=65 // loop_exit
                  _
                %s618 = sshrl.u32 %s509, 3
                %s619 = sand.u32 %s509, 7
                %s620 = smul.u32 %s618, 8
                %s621 = smul.u32 8, %s620
                %s622 = scalar_lea.vmem %s502, %s621 [#allocation2]
                %s623 = smul.u32 8, %s620
                %s624 = scalar_lea.vmem %s515, %s623
                // While loop
                $region74: #{fwd.7} parent=65 // loop_pre_header
                  _
                $region75: #{fwd.7} parent=65 // loop_header
                  %s626 = sphi 0, %s628
                  %p627 = scmp.ge.s32.totalorder %s626, %s619
                  %s631 = sphi 0, %s638
                  %s632 = sphi %s622, %s641
                  %s633 = sphi %s624, %s642
                $region76: #{fwd.7} parent=65 // loop_header_branch
                  %630 = sbr.rel (%p627) target = $region80
                $region77: #{fwd.7} parent=65 // loop_body
                  %v634 = vld [vmem:[%s632] sm:$0xff]
                  %635 = vst [vmem:[%s633] sm:$0xff] %v634
                  %s636 = sadd.s32 1, %s631
                  %p637 = scmp.ge.s32.totalorder %s636, %s619
                  %s638 = scalar_select %p637, 0, %s636
                  %s639 = smul.u32 %s638, 8
                  %s640 = smul.u32 %s638, 8
                  %s641 = scalar_lea.vmem %s622, %s639 [#allocation2]
                  %s642 = scalar_lea.vmem %s624, %s640
                $region78: #{fwd.7} parent=65 // loop_footer
                  %s628 = sadd.s32 %s626, 1
                $region79: #{fwd.7} parent=65 // loop_footer_branch
                  %625 = sbr.rel target = $region75
                $region80: #{fwd.7} parent=65 // loop_exit
                  _
              $region66: #{fwd.7} parent=43 // pred_fallthru
                _
              // Predicated region
              $region81: #{fwd.7} parent=43 // pred_check
                _
              $region82: #{fwd.7} parent=43 // pred_check_branch
                %644 = sbr.rel target = $region84
              $region83: #{fwd.7} parent=43 // pred_region
                _
              $region84: #{fwd.7} parent=43 // pred_fallthru
                _
            $region44: #{fwd.7} parent=39 // pred_fallthru
              _
            // Predicated region
            $region45: #{fwd.7} parent=39 // pred_check
              _
            $region46: #{fwd.7} parent=39 // pred_check_branch
              %522 = sbr.rel target = $region48
            $region47: #{fwd.7} parent=39 // pred_region
              %s524 = ssub.s32 256, 1
              %s525 = sshrl.u32 %s509, 3
              // While loop
              $region49: #{fwd.7} parent=47 // loop_pre_header
                _
              $region50: #{fwd.7} parent=47 // loop_header
                %s527 = sphi 0, %s529
                %p528 = scmp.ge.s32.totalorder %s527, %s525
                %s532 = sphi 0, %s553
                %s533 = sphi %s502, %s556
                %s534 = sphi %s515, %s557
              $region51: #{fwd.7} parent=47 // loop_header_branch
                %531 = sbr.rel (%p528) target = $region55
              $region52: #{fwd.7} parent=47 // loop_body
                %v535 = vld [vmem:[%s533] sm:%s524]
                %536 = vst [vmem:[%s534] sm:%s524] %v535
                %v537 = vld [vmem:[%s533 + $0x8] sm:%s524]
                %538 = vst [vmem:[%s534 + $0x8] sm:%s524] %v537
                %v539 = vld [vmem:[%s533 + $0x10] sm:%s524]
                %540 = vst [vmem:[%s534 + $0x10] sm:%s524] %v539
                %v541 = vld [vmem:[%s533 + $0x18] sm:%s524]
                %542 = vst [vmem:[%s534 + $0x18] sm:%s524] %v541
                %v543 = vld [vmem:[%s533 + $0x20] sm:%s524]
                %544 = vst [vmem:[%s534 + $0x20] sm:%s524] %v543
                %v545 = vld [vmem:[%s533 + $0x28] sm:%s524]
                %546 = vst [vmem:[%s534 + $0x28] sm:%s524] %v545
                %v547 = vld [vmem:[%s533 + $0x30] sm:%s524]
                %548 = vst [vmem:[%s534 + $0x30] sm:%s524] %v547
                %v549 = vld [vmem:[%s533 + $0x38] sm:%s524]
                %550 = vst [vmem:[%s534 + $0x38] sm:%s524] %v549
                %s551 = sadd.s32 1, %s532
                %p552 = scmp.ge.s32.totalorder %s551, %s525
                %s553 = scalar_select %p552, 0, %s551
                %s554 = smul.u32 %s553, 64
                %s555 = smul.u32 %s553, 64
                %s556 = scalar_lea.vmem %s502, %s554 [#allocation2]
                %s557 = scalar_lea.vmem %s515, %s555
              $region53: #{fwd.7} parent=47 // loop_footer
                %s529 = sadd.s32 %s527, 1
              $region54: #{fwd.7} parent=47 // loop_footer_branch
                %526 = sbr.rel target = $region50
              $region55: #{fwd.7} parent=47 // loop_exit
                _
              %s558 = sshrl.u32 %s509, 3
              %s559 = sand.u32 %s509, 7
              %s560 = smul.u32 %s558, 8
              %s561 = smul.u32 8, %s560
              %s562 = scalar_lea.vmem %s502, %s561 [#allocation2]
              %s563 = smul.u32 8, %s560
              %s564 = scalar_lea.vmem %s515, %s563
              // While loop
              $region56: #{fwd.7} parent=47 // loop_pre_header
                _
              $region57: #{fwd.7} parent=47 // loop_header
                %s566 = sphi 0, %s568
                %p567 = scmp.ge.s32.totalorder %s566, %s559
                %s571 = sphi 0, %s578
                %s572 = sphi %s562, %s581
                %s573 = sphi %s564, %s582
              $region58: #{fwd.7} parent=47 // loop_header_branch
                %570 = sbr.rel (%p567) target = $region62
              $region59: #{fwd.7} parent=47 // loop_body
                %v574 = vld [vmem:[%s572] sm:%s524]
                %575 = vst [vmem:[%s573] sm:%s524] %v574
                %s576 = sadd.s32 1, %s571
                %p577 = scmp.ge.s32.totalorder %s576, %s559
                %s578 = scalar_select %p577, 0, %s576
                %s579 = smul.u32 %s578, 8
                %s580 = smul.u32 %s578, 8
                %s581 = scalar_lea.vmem %s562, %s579 [#allocation2]
                %s582 = scalar_lea.vmem %s564, %s580
              $region60: #{fwd.7} parent=47 // loop_footer
                %s568 = sadd.s32 %s566, 1
              $region61: #{fwd.7} parent=47 // loop_footer_branch
                %565 = sbr.rel target = $region57
              $region62: #{fwd.7} parent=47 // loop_exit
                _
            $region48: #{fwd.7} parent=39 // pred_fallthru
              _
          $region40: #{fwd.7} parent=35 // pred_fallthru
            _
          %645 = vnop
        $region36: #{fwd.7} parent=31 // pred_fallthru
          _
      $region32: #{fwd.7} parent=5 // pred_fallthru
        _
      %p646 = scmp.le.s32.totalorder 2, %s9
      // Predicated region
      $region85: #{fwd.7} parent=5 // pred_check
        %p647 = pneg %p646
      $region86: #{fwd.7} parent=5 // pred_check_branch
        %649 = sbr.rel (%p647) target = $region88
      $region87: #{fwd.7} parent=5 // pred_region
        %s650 = ssub.s32 %s9, 2
        // Predicated region
        $region89: #{fwd.7} parent=87 // pred_check
          %p651 = pneg %p132
        $region90: #{fwd.7} parent=87 // pred_check_branch
          %653 = sbr.rel (%p651) target = $region92
        $region91: #{fwd.7} parent=87 // pred_region
          %s654 = sand.u32 %s117, 1
          %s655 = sand.u32 %s117, 1
          %s656 = smul.addr %s655, 64
          %s657 = scalar_lea.vmem [#allocation2], %s656
        $region92: #{fwd.7} parent=87 // pred_fallthru
          _
      $region88: #{fwd.7} parent=5 // pred_fallthru
        _
    $region6: #{fwd.7} parent=1 // loop_footer
      %s13 = sadd.s32 1, %s9
    $region7: #{fwd.7} parent=1 // loop_footer_branch
      %8 = sbr.rel target = $region3
    $region8: #{fwd.7} parent=1 // loop_exit
      _

// kernel: fwd.6
$region0: #{fwd.6}
  #allocation0 [shape = 'u32[]', space=smem, size = 0x4, offset = 0x4, fixed_abs, tag = 'smem constant byte address 0x4 - core index']
  #allocation1 [shape = 'u32[72,128]{1,0:T(1,128)}', space=vmem, size = 0x9000, scoped, tag = 'internal scratch']
  %s0 = inlined_call_operand.vmem [shape: bf16[2,72,36], index: 0, kind: input, shape index: {}]
  %s1 = inlined_call_operand.vmem [shape: bf16[2,36,8], index: 1, kind: input, shape index: {}]
  %s2 = inlined_call_operand.vmem [shape: f32[2,1,8], index: 2, kind: input, shape index: {}]
  %s3 = inlined_call_operand.vmem [shape: bf16[2,72,8], index: 3, kind: output, shape index: {}]
  %s4 = sld [smem:[#allocation0]]
  $region89: #{fwd.6} parent=0
    _
  %s6 = ssub.s32 1, %s4
  %s7 = scalar_select 0, %s6, %s4
  $region1: #{fwd.6} parent=0
    #allocation2 [shape = 'u8[32768]{0}', space=vmem, size = 0x8000, scoped, tag = 'output window, operand 0']
    loop: start=0, step=1, limit=6
    $region2: #{fwd.6} parent=1 // loop_pre_header
      _
    $region3: #{fwd.6} parent=1 // loop_header
      %s9 = sphi 0, %s13
      %p10 = scmp.ge.s32.totalorder %s9, 6
      %s16 = sphi 0, %s28
      %s17 = sphi 0, %s24
      %s18 = sphi 0, %s16
      %s19 = sphi 0, %s17
      %s20 = sphi 0, %s18
      %s21 = sphi 0, %s19
      %s33 = sphi 0, %s35
      %s36 = sphi 0, %s33
      %s37 = sphi 0, %s36
      %s53 = sphi 0, %s37
      %s59 = sphi 0, %s61
      %s62 = sphi 0, %s59
      %s63 = sphi 0, %s62
      %s79 = sphi 0, %s63
      %s85 = sphi 0, %s87
      %s88 = sphi 0, %s85
      %s89 = sphi 0, %s88
      %s105 = sphi 0, %s89
      %s113 = sphi 0, %s115
      %s116 = sphi 0, %s113
      %s117 = sphi 0, %s116
      %s133 = sphi 0, %s117
    $region4: #{fwd.6} parent=1 // loop_header_branch
      %12 = sbr.rel (%p10) target = $region8
    $region5: #{fwd.6} parent=1 // loop_body
      %s14 = ssub.s32 %s9, 1
      %s15 = ssub.s32 %s9, 2
      %s22 = sadd.s32 1, %s17
      %p23 = scmp.ge.s32.totalorder %s22, 2
      %s24 = scalar_select %p23, 0, %s22
      %s25 = sadd.s32 1, %s16
      %s26 = scalar_select %p23, %s25, %s16
      %p27 = scmp.ge.s32.totalorder %s26, 2
      %s28 = scalar_select %p27, 0, %s26
      %s29 = ssub.s32 %s16, %s28
      %s30 = ssub.s32 %s17, %s24
      %s31 = sor.u32 %s29, %s30
      %p32 = scmp.eq.s32.totalorder %s31, 0
      %s34 = sadd.s32 %s33, 1
      %s35 = scalar_select %p32, %s33, %s34
      %p38 = pneg %p32
      %p39 = scmp.eq.s32.totalorder %s9, 3
      %p40 = por %p38, %p39
      %p41 = scmp.ne.s32.totalorder %s33, %s36
      %p42 = scmp.eq.s32.totalorder %s9, 0
      %p43 = por %p41, %p42
      %p44 = scmp.ne.s32.totalorder %s33, %s36
      %p45 = scmp.eq.s32.totalorder %s14, 3
      %p46 = por %p44, %p45
      %p47 = scmp.ne.s32.totalorder %s36, %s37
      %p48 = scmp.eq.s32.totalorder %s14, 0
      %p49 = por %p47, %p48
      %p50 = scmp.ne.s32.totalorder %s36, %s37
      %p51 = scmp.eq.s32.totalorder %s15, 3
      %p52 = por %p50, %p51
      %p54 = scmp.ne.s32.totalorder %s37, %s53
      %p55 = scmp.eq.s32.totalorder %s15, 0
      %p56 = por %p54, %p55
      %s57 = ssub.s32 %s16, %s28
      %p58 = scmp.eq.s32.totalorder %s57, 0
      %s60 = sadd.s32 %s59, 1
      %s61 = scalar_select %p58, %s59, %s60
      %p64 = pneg %p58
      %p65 = scmp.eq.s32.totalorder %s9, 3
      %p66 = por %p64, %p65
      %p67 = scmp.ne.s32.totalorder %s59, %s62
      %p68 = scmp.eq.s32.totalorder %s9, 0
      %p69 = por %p67, %p68
      %p70 = scmp.ne.s32.totalorder %s59, %s62
      %p71 = scmp.eq.s32.totalorder %s14, 3
      %p72 = por %p70, %p71
      %p73 = scmp.ne.s32.totalorder %s62, %s63
      %p74 = scmp.eq.s32.totalorder %s14, 0
      %p75 = por %p73, %p74
      %p76 = scmp.ne.s32.totalorder %s62, %s63
      %p77 = scmp.eq.s32.totalorder %s15, 3
      %p78 = por %p76, %p77
      %p80 = scmp.ne.s32.totalorder %s63, %s79
      %p81 = scmp.eq.s32.totalorder %s15, 0
      %p82 = por %p80, %p81
      %s83 = ssub.s32 %s16, %s28
      %p84 = scmp.eq.s32.totalorder %s83, 0
      %s86 = sadd.s32 %s85, 1
      %s87 = scalar_select %p84, %s85, %s86
      %p90 = pneg %p84
      %p91 = scmp.eq.s32.totalorder %s9, 3
      %p92 = por %p90, %p91
      %p93 = scmp.ne.s32.totalorder %s85, %s88
      %p94 = scmp.eq.s32.totalorder %s9, 0
      %p95 = por %p93, %p94
      %p96 = scmp.ne.s32.totalorder %s85, %s88
      %p97 = scmp.eq.s32.totalorder %s14, 3
      %p98 = por %p96, %p97
      %p99 = scmp.ne.s32.totalorder %s88, %s89
      %p100 = scmp.eq.s32.totalorder %s14, 0
      %p101 = por %p99, %p100
      %p102 = scmp.ne.s32.totalorder %s88, %s89
      %p103 = scmp.eq.s32.totalorder %s15, 3
      %p104 = por %p102, %p103
      %p106 = scmp.ne.s32.totalorder %s89, %s105
      %p107 = scmp.eq.s32.totalorder %s15, 0
      %p108 = por %p106, %p107
      %s109 = ssub.s32 %s16, %s28
      %s110 = ssub.s32 %s17, %s24
      %s111 = sor.u32 %s109, %s110
      %p112 = scmp.eq.s32.totalorder %s111, 0
      %s114 = sadd.s32 %s113, 1
      %s115 = scalar_select %p112, %s113, %s114
      %p118 = pneg %p112
      %p119 = scmp.eq.s32.totalorder %s9, 3
      %p120 = por %p118, %p119
      %p121 = scmp.ne.s32.totalorder %s113, %s116
      %p122 = scmp.eq.s32.totalorder %s9, 0
      %p123 = por %p121, %p122
      %p124 = scmp.ne.s32.totalorder %s113, %s116
      %p125 = scmp.eq.s32.totalorder %s14, 3
      %p126 = por %p124, %p125
      %p127 = scmp.ne.s32.totalorder %s116, %s117
      %p128 = scmp.eq.s32.totalorder %s14, 0
      %p129 = por %p127, %p128
      %p130 = scmp.ne.s32.totalorder %s116, %s117
      %p131 = scmp.eq.s32.totalorder %s15, 3
      %p132 = por %p130, %p131
      %p134 = scmp.ne.s32.totalorder %s117, %s133
      %p135 = scmp.eq.s32.totalorder %s15, 0
      %p136 = por %p134, %p135
      %p137 = scmp.le.s32.totalorder 1, %s9
      %p138 = scmp.lt.s32.totalorder %s9, 5
      %p139 = pnand %p137, %p138
      %p140 = pneg %p139
      // Predicated region
      $region9: #{fwd.6} parent=5 // pred_check
        _
      $region10: #{fwd.6} parent=5 // pred_check_branch
        %142 = sbr.rel (%p139) target = $region12
      $region11: #{fwd.6} parent=5 // pred_region
        %s143 = ssub.s32 %s9, 1
      $region12: #{fwd.6} parent=5 // pred_fallthru
        _
      %p144 = scmp.lt.s32.totalorder %s9, 4
      // Predicated region
      $region13: #{fwd.6} parent=5 // pred_check
        %p145 = pneg %p144
      $region14: #{fwd.6} parent=5 // pred_check_branch
        %147 = sbr.rel (%p145) target = $region16
      $region15: #{fwd.6} parent=5 // pred_region
        // Predicated region
        $region17: #{fwd.6} parent=15 // pred_check
          %p148 = pneg %p43
        $region18: #{fwd.6} parent=15 // pred_check_branch
          %150 = sbr.rel (%p148) target = $region20
        $region19: #{fwd.6} parent=15 // pred_region
          %s151 = smul.u32 8, %s17
          %s152 = ssub.s32 9, %s151
          %p153 = scmp.lt.s32.totalorder %s152, 8
          %s154 = scalar_select %p153, %s152, 8
          %s155 = smul.u32 4, %s154
          %p156 = scmp.lt.s32.totalorder %s16, 1
          %s157 = scalar_select %p156, %s16, 1
          %p158 = scmp.lt.s32.totalorder %s151, 8
          %s159 = scalar_select %p158, %s151, 8
          %s160 = smul.addr %s157, 9
          %s161 = sadd.s32 %s159, %s160
          %s162 = smul.addr %s161, 4
          %s163 = scalar_lea.vmem %s0, %s162
          %s164 = smul.u32 8, %s17
          %s165 = ssub.s32 9, %s164
          %p166 = scmp.lt.s32.totalorder %s165, 8
          %s167 = scalar_select %p166, %s165, 8
          %s168 = smul.u32 4, %s167
        $region20: #{fwd.6} parent=15 // pred_fallthru
          _
        // Predicated region
        $region21: #{fwd.6} parent=15 // pred_check
          %p169 = pneg %p69
        $region22: #{fwd.6} parent=15 // pred_check_branch
          %171 = sbr.rel (%p169) target = $region24
        $region23: #{fwd.6} parent=15 // pred_region
          %p172 = scmp.lt.s32.totalorder %s16, 1
          %s173 = scalar_select %p172, %s16, 1
          %s174 = smul.addr %s173, 5
          %s175 = smul.addr %s174, 4
          %s176 = scalar_lea.vmem %s1, %s175
        $region24: #{fwd.6} parent=15 // pred_fallthru
          _
        // Predicated region
        $region25: #{fwd.6} parent=15 // pred_check
          %p177 = pneg %p95
        $region26: #{fwd.6} parent=15 // pred_check_branch
          %179 = sbr.rel (%p177) target = $region28
        $region27: #{fwd.6} parent=15 // pred_region
          %p180 = scmp.lt.s32.totalorder %s16, 1
          %s181 = scalar_select %p180, %s16, 1
          %s182 = scalar_lea.vmem %s2, %s181
        $region28: #{fwd.6} parent=15 // pred_fallthru
          _
      $region16: #{fwd.6} parent=5 // pred_fallthru
        _
      %p183 = scmp.le.s32.totalorder 1, %s9
      %p184 = scmp.lt.s32.totalorder %s9, 5
      %p185 = pnand %p183, %p184
      %p186 = pneg %p185
      // Predicated region
      $region29: #{fwd.6} parent=5 // pred_check
        _
      $region30: #{fwd.6} parent=5 // pred_check_branch
        %188 = sbr.rel (%p185) target = $region32
      $region31: #{fwd.6} parent=5 // pred_region
        %s189 = ssub.s32 %s9, 1
        %s190 = smul.u32 8, %s19
        %s191 = ssub.s32 9, %s190
        %p192 = scmp.lt.s32.totalorder %s191, 8
        %s193 = scalar_select %p192, %s191, 8
        %s194 = smul.u32 4, %s193
        %p195 = scmp.lt.s32.totalorder %s18, 1
        %s196 = scalar_select %p195, %s18, 1
        %p197 = scmp.lt.s32.totalorder %s190, 8
        %s198 = scalar_select %p197, %s190, 8
        %s199 = smul.addr %s196, 9
        %s200 = sadd.s32 %s198, %s199
        %s201 = smul.addr %s200, 4
        %s202 = scalar_lea.vmem %s0, %s201
        %p203 = pneg %p49
        %p204 = pneg %p46
        %p205 = scmp.lt.s32.totalorder %s18, 1
        %s206 = scalar_select %p205, %s18, 1
        %s207 = smul.addr %s206, 5
        %s208 = smul.addr %s207, 4
        %s209 = scalar_lea.vmem %s1, %s208
        %p210 = pneg %p75
        %p211 = pneg %p72
        %p212 = scmp.lt.s32.totalorder %s18, 1
        %s213 = scalar_select %p212, %s18, 1
        %s214 = scalar_lea.vmem %s2, %s213
        %p215 = pneg %p101
        %p216 = pneg %p98
        %p217 = pneg %p129
        %p218 = pneg %p126
        %s219 = sand.u32 %s116, 1
        %s220 = sand.u32 %s116, 1
        %s221 = smul.addr %s220, 32
        %s222 = scalar_lea.vmem [#allocation2], %s221
        %s223 = smul.u32 8, %s19
        %s224 = ssub.s32 9, %s223
        %p225 = scmp.lt.s32.totalorder %s224, 8
        %s226 = scalar_select %p225, %s224, 8
        %s227 = smul.u32 4, %s226
        %p228 = scmp.lt.s32.totalorder %s18, 1
        %s229 = scalar_select %p228, %s18, 1
        %p230 = scmp.lt.s32.totalorder %s223, 8
        %s231 = scalar_select %p230, %s223, 8
        %s232 = smul.addr %s229, 9
        %s233 = sadd.s32 %s231, %s232
        %s234 = smul.addr %s233, 4
        %s235 = scalar_lea.vmem %s0, %s234
        %s236 = smul.u32 8, %s19
        %s237 = ssub.s32 9, %s236
        %p238 = scmp.lt.s32.totalorder %s237, 8
        %s239 = scalar_select %p238, %s237, 8
        %s240 = smul.u32 4, %s239
        %p241 = scmp.lt.s32.totalorder %s18, 1
        %s242 = scalar_select %p241, %s18, 1
        %s243 = smul.addr %s242, 5
        %s244 = smul.addr %s243, 4
        %s245 = scalar_lea.vmem %s1, %s244
        %p246 = scmp.lt.s32.totalorder %s18, 1
        %s247 = scalar_select %p246, %s18, 1
        %s248 = scalar_lea.vmem %s2, %s247
        %s249 = smul.u32 8, %s19
        %s250 = ssub.s32 9, %s249
        %p251 = scmp.lt.s32.totalorder %s250, 8
        %s252 = scalar_select %p251, %s250, 8
        %s253 = smul.u32 4, %s252
        %v255 = vld [vmem:[%s235] sm:$0xf]
        %v256 = vld [vmem:[%s235 + $0x4] sm:$0xf]
        %v257 = vld [vmem:[%s235 + $0x8] sm:$0xf]
        %v258 = vld [vmem:[%s235 + $0xc] sm:$0xf]
        %v259 = vld [vmem:[%s235 + $0x10] sm:$0xf]
        %v260 = vld [vmem:[%s235 + $0x14] sm:$0xf]
        %v261 = vld [vmem:[%s235 + $0x18] sm:$0xf]
        %v262 = vld [vmem:[%s235 + $0x1c] sm:$0xf]
        %v263 = vld [vmem:[%s245] sm:$0xf]
        %v264 = vld [vmem:[%s245 + $0x4] sm:$0xf]
        %v265 = vld [vmem:[%s245 + $0x8] sm:$0xf]
        %v266 = vld [vmem:[%s245 + $0xc] sm:$0xf]
        %v267 = vld [vmem:[%s245 + $0x10] sm:$0x3]
        %v268 = vld [vmem:[%s248] sm:$0x1]
        %v270 = vperm.slane %v268, 0
        %v280 = vunpack.c.l.b16 %v255
        %v281 = vunpack.c.l.b16 %v256
        %v282 = vunpack.c.l.b16 %v257
        %v283 = vunpack.c.l.b16 %v258
        %v284 = vunpack.c.l.b16 %v259
        %v285 = vunpack.c.l.b16 %v260
        %v286 = vunpack.c.l.b16 %v261
        %v287 = vunpack.c.l.b16 %v262
        %v288 = vpack.c.b16 %v281, %v280
        %v289 = vpack.c.b16 %v283, %v282
        %v290 = vpack.c.b16 %v285, %v284
        %v291 = vpack.c.b16 %v287, %v286
        %v297 = vunpack.c.l.b16 %v263
        %v298 = vunpack.c.l.b16 %v264
        %v299 = vunpack.c.l.b16 %v265
        %v300 = vunpack.c.l.b16 %v266
        %v301 = vunpack.c.l.b16 %v267
        %v302 = vpack.c.b16 %v298, %v297
        %v303 = vpack.c.b16 %v300, %v299
        %v304 = vpack.c.b16 %v301, %v301
        %vm307 = vcmask 293888
        %v309 = vsel %vm307, %v288, 0
        %v312 = vsel %vm307, %v289, 0
        %v315 = vsel %vm307, %v290, 0
        %v318 = vsel %vm307, %v291, 0
        %vm320 = vcmask 1041408
        %v322 = vsel %vm320, %v304, 0
        %324 = vmatpush.bf16.msra.mxu0 0
        %325 = vmatpush.bf16.msra.mxu0 0
        %326 = vmatpush.bf16.msra.mxu0 0
        %327 = vmatpush.bf16.msra.mxu0 0
        %328 = vmatpush.bf16.msra.mxu0 0
        %329 = vmatpush.bf16.msra.mxu0 %v322
        %330 = vmatpush.bf16.msra.mxu0 %v303
        %331 = vmatpush.bf16.msra.mxu0 %v302
        %332 = vmatmul.bf16.gmra.mxu0 %v309
        %v333 = vpop.f32.mrf.mxu0
        %v334 = vadd.f32 %v270, %v333
        %v335 = vpop.f32.mrf.mxu0
        %v336 = vadd.f32 %v270, %v335
        %337 = vmatmul.bf16.gmra.mxu0 %v312
        %v338 = vpop.f32.mrf.mxu0
        %v339 = vadd.f32 %v270, %v338
        %v340 = vpop.f32.mrf.mxu0
        %v341 = vadd.f32 %v270, %v340
        %342 = vmatmul.bf16.gmra.mxu0 %v315
        %v343 = vpop.f32.mrf.mxu0
        %v344 = vadd.f32 %v270, %v343
        %v345 = vpop.f32.mrf.mxu0
        %v346 = vadd.f32 %v270, %v345
        %347 = vmatmul.bf16.gmra.mxu0 %v318
        %v348 = vpop.f32.mrf.mxu0
        %v349 = vadd.f32 %v270, %v348
        %v350 = vpop.f32.mrf.mxu0
        %v351 = vadd.f32 %v270, %v350
        %352 = vdwg.mxu0
        %v353 = vpack.c.bf16 %v334, %v334
        %v354 = vpack.c.bf16 %v336, %v336
        %v355 = vpack.c.bf16 %v339, %v339
        %v356 = vpack.c.bf16 %v341, %v341
        %v357 = vpack.c.bf16 %v344, %v344
        %v358 = vpack.c.bf16 %v346, %v346
        %v359 = vpack.c.bf16 %v349, %v349
        %v360 = vpack.c.bf16 %v351, %v351
        %vm361 = vcmask 60416
        %362 = vst.msk [vmem:[%s222] sm:$0xf] %vm361, %v353
        %363 = vst.msk [vmem:[%s222 + $0x4] sm:$0xf] %vm361, %v354
        %364 = vst.msk [vmem:[%s222 + $0x8] sm:$0xf] %vm361, %v355
        %365 = vst.msk [vmem:[%s222 + $0xc] sm:$0xf] %vm361, %v356
        %366 = vst.msk [vmem:[%s222 + $0x10] sm:$0xf] %vm361, %v357
        %367 = vst.msk [vmem:[%s222 + $0x14] sm:$0xf] %vm361, %v358
        %368 = vst.msk [vmem:[%s222 + $0x18] sm:$0xf] %vm361, %v359
        %369 = vst.msk [vmem:[%s222 + $0x1c] sm:$0xf] %vm361, %v360
        %s370 = sand.u32 %s116, 1
        %s371 = sand.u32 %s116, 1
        %s372 = smul.addr %s371, 32
        %s373 = scalar_lea.vmem [#allocation2], %s372
        // Predicated region
        $region33: #{fwd.6} parent=31 // pred_check
          %p374 = pneg %p126
        $region34: #{fwd.6} parent=31 // pred_check_branch
          %376 = sbr.rel (%p374) target = $region36
        $region35: #{fwd.6} parent=31 // pred_region
          %s377 = smul.u32 8, %s19
          %s378 = ssub.s32 9, %s377
          %p379 = scmp.lt.s32.totalorder %s378, 8
          %s380 = scalar_select %p379, %s378, 8
          %s381 = smul.u32 4, %s380
          %p382 = scmp.ne.s32.totalorder 0, %s381
          %s383 = smul.addr %s18, 9
          %s384 = sadd.s32 %s377, %s383
          %s385 = smul.addr %s384, 4
          %s386 = scalar_lea.vmem %s3, %s385
          // Predicated region
          $region37: #{fwd.6} parent=35 // pred_check
            %p387 = pneg %p382
          $region38: #{fwd.6} parent=35 // pred_check_branch
            %389 = sbr.rel (%p387) target = $region40
          $region39: #{fwd.6} parent=35 // pred_region
            // Predicated region
            $region41: #{fwd.6} parent=39 // pred_check
              _
            $region42: #{fwd.6} parent=39 // pred_check_branch
              %391 = sbr.rel target = $region44
            $region43: #{fwd.6} parent=39 // pred_region
              // Predicated region
              $region63: #{fwd.6} parent=43 // pred_check
                _
              $region64: #{fwd.6} parent=43 // pred_check_branch
                %455 = sbr.rel (0) target = $region66
              $region65: #{fwd.6} parent=43 // pred_region
                %s457 = ssub.s32 16, 1
                %s458 = sshrl.u32 %s380, 3
                // While loop
                $region67: #{fwd.6} parent=65 // loop_pre_header
                  _
                $region68: #{fwd.6} parent=65 // loop_header
                  %s460 = sphi 0, %s462
                  %p461 = scmp.ge.s32.totalorder %s460, %s458
                  %s465 = sphi 0, %s486
                  %s466 = sphi %s373, %s489
                  %s467 = sphi %s386, %s490
                $region69: #{fwd.6} parent=65 // loop_header_branch
                  %464 = sbr.rel (%p461) target = $region73
                $region70: #{fwd.6} parent=65 // loop_body
                  %v468 = vld [vmem:[%s466] sm:%s457]
                  %469 = vst [vmem:[%s467] sm:%s457] %v468
                  %v470 = vld [vmem:[%s466 + $0x4] sm:%s457]
                  %471 = vst [vmem:[%s467 + $0x4] sm:%s457] %v470
                  %v472 = vld [vmem:[%s466 + $0x8] sm:%s457]
                  %473 = vst [vmem:[%s467 + $0x8] sm:%s457] %v472
                  %v474 = vld [vmem:[%s466 + $0xc] sm:%s457]
                  %475 = vst [vmem:[%s467 + $0xc] sm:%s457] %v474
                  %v476 = vld [vmem:[%s466 + $0x10] sm:%s457]
                  %477 = vst [vmem:[%s467 + $0x10] sm:%s457] %v476
                  %v478 = vld [vmem:[%s466 + $0x14] sm:%s457]
                  %479 = vst [vmem:[%s467 + $0x14] sm:%s457] %v478
                  %v480 = vld [vmem:[%s466 + $0x18] sm:%s457]
                  %481 = vst [vmem:[%s467 + $0x18] sm:%s457] %v480
                  %v482 = vld [vmem:[%s466 + $0x1c] sm:%s457]
                  %483 = vst [vmem:[%s467 + $0x1c] sm:%s457] %v482
                  %s484 = sadd.s32 1, %s465
                  %p485 = scmp.ge.s32.totalorder %s484, %s458
                  %s486 = scalar_select %p485, 0, %s484
                  %s487 = smul.u32 %s486, 32
                  %s488 = smul.u32 %s486, 32
                  %s489 = scalar_lea.vmem %s373, %s487 [#allocation2]
                  %s490 = scalar_lea.vmem %s386, %s488
                $region71: #{fwd.6} parent=65 // loop_footer
                  %s462 = sadd.s32 %s460, 1
                $region72: #{fwd.6} parent=65 // loop_footer_branch
                  %459 = sbr.rel target = $region68
                $region73: #{fwd.6} parent=65 // loop_exit
                  _
                %s491 = sshrl.u32 %s380, 3
                %s492 = sand.u32 %s380, 7
                %s493 = smul.u32 %s491, 8
                %s494 = smul.u32 4, %s493
                %s495 = scalar_lea.vmem %s373, %s494 [#allocation2]
                %s496 = smul.u32 4, %s493
                %s497 = scalar_lea.vmem %s386, %s496
                // While loop
                $region74: #{fwd.6} parent=65 // loop_pre_header
                  _
                $region75: #{fwd.6} parent=65 // loop_header
                  %s499 = sphi 0, %s501
                  %p500 = scmp.ge.s32.totalorder %s499, %s492
                  %s504 = sphi 0, %s511
                  %s505 = sphi %s495, %s514
                  %s506 = sphi %s497, %s515
                $region76: #{fwd.6} parent=65 // loop_header_branch
                  %503 = sbr.rel (%p500) target = $region80
                $region77: #{fwd.6} parent=65 // loop_body
                  %v507 = vld [vmem:[%s505] sm:%s457]
                  %508 = vst [vmem:[%s506] sm:%s457] %v507
                  %s509 = sadd.s32 1, %s504
                  %p510 = scmp.ge.s32.totalorder %s509, %s492
                  %s511 = scalar_select %p510, 0, %s509
                  %s512 = smul.u32 %s511, 4
                  %s513 = smul.u32 %s511, 4
                  %s514 = scalar_lea.vmem %s495, %s512 [#allocation2]
                  %s515 = scalar_lea.vmem %s497, %s513
                $region78: #{fwd.6} parent=65 // loop_footer
                  %s501 = sadd.s32 %s499, 1
                $region79: #{fwd.6} parent=65 // loop_footer_branch
                  %498 = sbr.rel target = $region75
                $region80: #{fwd.6} parent=65 // loop_exit
                  _
              $region66: #{fwd.6} parent=43 // pred_fallthru
                _
            $region44: #{fwd.6} parent=39 // pred_fallthru
              _
            // Predicated region
            $region45: #{fwd.6} parent=39 // pred_check
              _
            $region46: #{fwd.6} parent=39 // pred_check_branch
              %393 = sbr.rel (0) target = $region48
            $region47: #{fwd.6} parent=39 // pred_region
              %s395 = ssub.s32 16, 1
              %s396 = sshrl.u32 %s380, 3
              // While loop
              $region49: #{fwd.6} parent=47 // loop_pre_header
                _
              $region50: #{fwd.6} parent=47 // loop_header
                %s398 = sphi 0, %s400
                %p399 = scmp.ge.s32.totalorder %s398, %s396
                %s403 = sphi 0, %s424
                %s404 = sphi %s373, %s427
                %s405 = sphi %s386, %s428
              $region51: #{fwd.6} parent=47 // loop_header_branch
                %402 = sbr.rel (%p399) target = $region55
              $region52: #{fwd.6} parent=47 // loop_body
                %v406 = vld [vmem:[%s404] sm:%s395]
                %407 = vst [vmem:[%s405] sm:%s395] %v406
                %v408 = vld [vmem:[%s404 + $0x4] sm:%s395]
                %409 = vst [vmem:[%s405 + $0x4] sm:%s395] %v408
                %v410 = vld [vmem:[%s404 + $0x8] sm:%s395]
                %411 = vst [vmem:[%s405 + $0x8] sm:%s395] %v410
                %v412 = vld [vmem:[%s404 + $0xc] sm:%s395]
                %413 = vst [vmem:[%s405 + $0xc] sm:%s395] %v412
                %v414 = vld [vmem:[%s404 + $0x10] sm:%s395]
                %415 = vst [vmem:[%s405 + $0x10] sm:%s395] %v414
                %v416 = vld [vmem:[%s404 + $0x14] sm:%s395]
                %417 = vst [vmem:[%s405 + $0x14] sm:%s395] %v416
                %v418 = vld [vmem:[%s404 + $0x18] sm:%s395]
                %419 = vst [vmem:[%s405 + $0x18] sm:%s395] %v418
                %v420 = vld [vmem:[%s404 + $0x1c] sm:%s395]
                %421 = vst [vmem:[%s405 + $0x1c] sm:%s395] %v420
                %s422 = sadd.s32 1, %s403
                %p423 = scmp.ge.s32.totalorder %s422, %s396
                %s424 = scalar_select %p423, 0, %s422
                %s425 = smul.u32 %s424, 32
                %s426 = smul.u32 %s424, 32
                %s427 = scalar_lea.vmem %s373, %s425 [#allocation2]
                %s428 = scalar_lea.vmem %s386, %s426
              $region53: #{fwd.6} parent=47 // loop_footer
                %s400 = sadd.s32 %s398, 1
              $region54: #{fwd.6} parent=47 // loop_footer_branch
                %397 = sbr.rel target = $region50
              $region55: #{fwd.6} parent=47 // loop_exit
                _
              %s429 = sshrl.u32 %s380, 3
              %s430 = sand.u32 %s380, 7
              %s431 = smul.u32 %s429, 8
              %s432 = smul.u32 4, %s431
              %s433 = scalar_lea.vmem %s373, %s432 [#allocation2]
              %s434 = smul.u32 4, %s431
              %s435 = scalar_lea.vmem %s386, %s434
              // While loop
              $region56: #{fwd.6} parent=47 // loop_pre_header
                _
              $region57: #{fwd.6} parent=47 // loop_header
                %s437 = sphi 0, %s439
                %p438 = scmp.ge.s32.totalorder %s437, %s430
                %s442 = sphi 0, %s449
                %s443 = sphi %s433, %s452
                %s444 = sphi %s435, %s453
              $region58: #{fwd.6} parent=47 // loop_header_branch
                %441 = sbr.rel (%p438) target = $region62
              $region59: #{fwd.6} parent=47 // loop_body
                %v445 = vld [vmem:[%s443] sm:%s395]
                %446 = vst [vmem:[%s444] sm:%s395] %v445
                %s447 = sadd.s32 1, %s442
                %p448 = scmp.ge.s32.totalorder %s447, %s430
                %s449 = scalar_select %p448, 0, %s447
                %s450 = smul.u32 %s449, 4
                %s451 = smul.u32 %s449, 4
                %s452 = scalar_lea.vmem %s433, %s450 [#allocation2]
                %s453 = scalar_lea.vmem %s435, %s451
              $region60: #{fwd.6} parent=47 // loop_footer
                %s439 = sadd.s32 %s437, 1
              $region61: #{fwd.6} parent=47 // loop_footer_branch
                %436 = sbr.rel target = $region57
              $region62: #{fwd.6} parent=47 // loop_exit
                _
            $region48: #{fwd.6} parent=39 // pred_fallthru
              _
          $region40: #{fwd.6} parent=35 // pred_fallthru
            _
          %516 = vnop
        $region36: #{fwd.6} parent=31 // pred_fallthru
          _
      $region32: #{fwd.6} parent=5 // pred_fallthru
        _
      %p517 = scmp.le.s32.totalorder 2, %s9
      // Predicated region
      $region81: #{fwd.6} parent=5 // pred_check
        %p518 = pneg %p517
      $region82: #{fwd.6} parent=5 // pred_check_branch
        %520 = sbr.rel (%p518) target = $region84
      $region83: #{fwd.6} parent=5 // pred_region
        %s521 = ssub.s32 %s9, 2
        // Predicated region
        $region85: #{fwd.6} parent=83 // pred_check
          %p522 = pneg %p132
        $region86: #{fwd.6} parent=83 // pred_check_branch
          %524 = sbr.rel (%p522) target = $region88
        $region87: #{fwd.6} parent=83 // pred_region
          %s525 = sand.u32 %s117, 1
          %s526 = sand.u32 %s117, 1
          %s527 = smul.addr %s526, 32
          %s528 = scalar_lea.vmem [#allocation2], %s527
        $region88: #{fwd.6} parent=83 // pred_fallthru
          _
      $region84: #{fwd.6} parent=5 // pred_fallthru
        _
    $region6: #{fwd.6} parent=1 // loop_footer
      %s13 = sadd.s32 1, %s9
    $region7: #{fwd.6} parent=1 // loop_footer_branch
      %8 = sbr.rel target = $region3
    $region8: #{fwd.6} parent=1 // loop_exit
      _

// kernel: squeeze.2
$region0: #{squeeze.2}
  %s0 = inlined_call_operand.vmem [shape: f32[1,72,8], index: 0, kind: input, shape index: {}]
  %s1 = inlined_call_operand.vmem [shape: f32[2,6,6,8], index: 1, kind: output, shape index: {}]
  %v2 = vld [vmem:[%s0] sm:$0xff]
  %vm3 = vcmask 48128
  %4 = vst.msk [vmem:[%s1] ss:$16 sm:$0x3] %vm3, %v2
  %5 = vst.msk [vmem:[%s1] ss:$16 sm:$0xc] %vm3, %v2
  %6 = vst.msk [vmem:[%s1] ss:$16 sm:$0x30] %vm3, %v2
  %7 = vst.msk [vmem:[%s1] ss:$16 sm:$0xc0] %vm3, %v2
  %v8 = vld [vmem:[%s0] sm:$0xff]
  %9 = vrot.lane.b32.xlu0 %v8, 122
  %v10 = vpop.permute.xlu0 %9
  %vm11 = vcmask 48128
  %s12 = scalar_lea.vmem %s1, 1
  %13 = vst.msk [vmem:[%s12] ss:$16 sm:$0x3] %vm11, %v10
  %s14 = scalar_lea.vmem %s1, 1
  %15 = vst.msk [vmem:[%s14] ss:$16 sm:$0xc] %vm11, %v10
  %s16 = scalar_lea.vmem %s1, 1
  %17 = vst.msk [vmem:[%s16] ss:$16 sm:$0x30] %vm11, %v10
  %s18 = scalar_lea.vmem %s1, 1
  %19 = vst.msk [vmem:[%s18] ss:$16 sm:$0xc0] %vm11, %v10
  %v20 = vld [vmem:[%s0] sm:$0xff]
  %21 = vrot.lane.b32.xlu0 %v20, 116
  %v22 = vpop.permute.xlu0 %21
  %vm23 = vcmask 48128
  %s24 = scalar_lea.vmem %s1, 2
  %25 = vst.msk [vmem:[%s24] ss:$16 sm:$0x3] %vm23, %v22
  %s26 = scalar_lea.vmem %s1, 2
  %27 = vst.msk [vmem:[%s26] ss:$16 sm:$0xc] %vm23, %v22
  %s28 = scalar_lea.vmem %s1, 2
  %29 = vst.msk [vmem:[%s28] ss:$16 sm:$0x30] %vm23, %v22
  %s30 = scalar_lea.vmem %s1, 2
  %31 = vst.msk [vmem:[%s30] ss:$16 sm:$0xc0] %vm23, %v22
  %v32 = vld [vmem:[%s0] sm:$0xff]
  %33 = vrot.lane.b32.xlu0 %v32, 110
  %v34 = vpop.permute.xlu0 %33
  %vm35 = vcmask 48128
  %s36 = scalar_lea.vmem %s1, 3
  %37 = vst.msk [vmem:[%s36] ss:$16 sm:$0x3] %vm35, %v34
  %s38 = scalar_lea.vmem %s1, 3
  %39 = vst.msk [vmem:[%s38] ss:$16 sm:$0xc] %vm35, %v34
  %s40 = scalar_lea.vmem %s1, 3
  %41 = vst.msk [vmem:[%s40] ss:$16 sm:$0x30] %vm35, %v34
  %s42 = scalar_lea.vmem %s1, 3
  %43 = vst.msk [vmem:[%s42] ss:$16 sm:$0xc0] %vm35, %v34
  %v44 = vld [vmem:[%s0] sm:$0xff]
  %45 = vrot.lane.b32.xlu0 %v44, 104
  %v46 = vpop.permute.xlu0 %45
  %vm47 = vcmask 48128
  %s48 = scalar_lea.vmem %s1, 4
  %49 = vst.msk [vmem:[%s48] ss:$16 sm:$0x3] %vm47, %v46
  %s50 = scalar_lea.vmem %s1, 4
  %51 = vst.msk [vmem:[%s50] ss:$16 sm:$0xc] %vm47, %v46
  %s52 = scalar_lea.vmem %s1, 4
  %53 = vst.msk [vmem:[%s52] ss:$16 sm:$0x30] %vm47, %v46
  %s54 = scalar_lea.vmem %s1, 4
  %55 = vst.msk [vmem:[%s54] ss:$16 sm:$0xc0] %vm47, %v46
  %v56 = vld [vmem:[%s0] sm:$0xff]
  %57 = vrot.lane.b32.xlu0 %v56, 98
  %v58 = vpop.permute.xlu0 %57
  %vm59 = vcmask 48128
  %s60 = scalar_lea.vmem %s1, 5
  %61 = vst.msk [vmem:[%s60] ss:$16 sm:$0x3] %vm59, %v58
  %s62 = scalar_lea.vmem %s1, 5
  %63 = vst.msk [vmem:[%s62] ss:$16 sm:$0xc] %vm59, %v58
  %s64 = scalar_lea.vmem %s1, 5
  %65 = vst.msk [vmem:[%s64] ss:$16 sm:$0x30] %vm59, %v58
  %s66 = scalar_lea.vmem %s1, 5
  %67 = vst.msk [vmem:[%s66] ss:$16 sm:$0xc0] %vm59, %v58
  %v68 = vld [vmem:[%s0] sm:$0xff]
  %69 = vrot.lane.b32.xlu0 %v68, 92
  %v70 = vpop.permute.xlu0 %69
  %vm71 = vcmask 48128
  %s72 = scalar_lea.vmem %s1, 8
  %73 = vst.msk [vmem:[%s72] ss:$16 sm:$0x3] %vm71, %v70
  %s74 = scalar_lea.vmem %s1, 8
  %75 = vst.msk [vmem:[%s74] ss:$16 sm:$0xc] %vm71, %v70
  %s76 = scalar_lea.vmem %s1, 8
  %77 = vst.msk [vmem:[%s76] ss:$16 sm:$0x30] %vm71, %v70
  %s78 = scalar_lea.vmem %s1, 8
  %79 = vst.msk [vmem:[%s78] ss:$16 sm:$0xc0] %vm71, %v70
  %v80 = vld [vmem:[%s0] sm:$0xff]
  %81 = vrot.lane.b32.xlu0 %v80, 86
  %v82 = vpop.permute.xlu0 %81
  %vm83 = vcmask 48128
  %s84 = scalar_lea.vmem %s1, 9
  %85 = vst.msk [vmem:[%s84] ss:$16 sm:$0x3] %vm83, %v82
  %s86 = scalar_lea.vmem %s1, 9
  %87 = vst.msk [vmem:[%s86] ss:$16 sm:$0xc] %vm83, %v82
  %s88 = scalar_lea.vmem %s1, 9
  %89 = vst.msk [vmem:[%s88] ss:$16 sm:$0x30] %vm83, %v82
  %s90 = scalar_lea.vmem %s1, 9
  %91 = vst.msk [vmem:[%s90] ss:$16 sm:$0xc0] %vm83, %v82
  %v92 = vld [vmem:[%s0] sm:$0xff]
  %93 = vrot.lane.b32.xlu0 %v92, 80
  %v94 = vpop.permute.xlu0 %93
  %vm95 = vcmask 48128
  %s96 = scalar_lea.vmem %s1, 10
  %97 = vst.msk [vmem:[%s96] ss:$16 sm:$0x3] %vm95, %v94
  %s98 = scalar_lea.vmem %s1, 10
  %99 = vst.msk [vmem:[%s98] ss:$16 sm:$0xc] %vm95, %v94
  %s100 = scalar_lea.vmem %s1, 10
  %101 = vst.msk [vmem:[%s100] ss:$16 sm:$0x30] %vm95, %v94
  %s102 = scalar_lea.vmem %s1, 10
  %103 = vst.msk [vmem:[%s102] ss:$16 sm:$0xc0] %vm95, %v94
  %v104 = vld [vmem:[%s0] sm:$0xff]
  %105 = vrot.lane.b32.xlu0 %v104, 74
  %v106 = vpop.permute.xlu0 %105
  %vm107 = vcmask 48128
  %s108 = scalar_lea.vmem %s1, 11
  %109 = vst.msk [vmem:[%s108] ss:$16 sm:$0x3] %vm107, %v106
  %s110 = scalar_lea.vmem %s1, 11
  %111 = vst.msk [vmem:[%s110] ss:$16 sm:$0xc] %vm107, %v106
  %s112 = scalar_lea.vmem %s1, 11
  %113 = vst.msk [vmem:[%s112] ss:$16 sm:$0x30] %vm107, %v106
  %s114 = scalar_lea.vmem %s1, 11
  %115 = vst.msk [vmem:[%s114] ss:$16 sm:$0xc0] %vm107, %v106
  %v116 = vld [vmem:[%s0] sm:$0xff]
  %117 = vrot.lane.b32.xlu0 %v116, 68
  %v118 = vpop.permute.xlu0 %117
  %vm119 = vcmask 48128
  %s120 = scalar_lea.vmem %s1, 12
  %121 = vst.msk [vmem:[%s120] ss:$16 sm:$0x3] %vm119, %v118
  %s122 = scalar_lea.vmem %s1, 12
  %123 = vst.msk [vmem:[%s122] ss:$16 sm:$0xc] %vm119, %v118
  %s124 = scalar_lea.vmem %s1, 12
  %125 = vst.msk [vmem:[%s124] ss:$16 sm:$0x30] %vm119, %v118
  %s126 = scalar_lea.vmem %s1, 12
  %127 = vst.msk [vmem:[%s126] ss:$16 sm:$0xc0] %vm119, %v118
  %v128 = vld [vmem:[%s0] sm:$0xff]
  %129 = vrot.lane.b32.xlu0 %v128, 62
  %v130 = vpop.permute.xlu0 %129
  %vm131 = vcmask 48128
  %s132 = scalar_lea.vmem %s1, 13
  %133 = vst.msk [vmem:[%s132] ss:$16 sm:$0x3] %vm131, %v130
  %s134 = scalar_lea.vmem %s1, 13
  %135 = vst.msk [vmem:[%s134] ss:$16 sm:$0xc] %vm131, %v130
  %s136 = scalar_lea.vmem %s1, 13
  %137 = vst.msk [vmem:[%s136] ss:$16 sm:$0x30] %vm131, %v130
  %s138 = scalar_lea.vmem %s1, 13
  %139 = vst.msk [vmem:[%s138] ss:$16 sm:$0xc0] %vm131, %v130

</llo_original>
